<compile_context>
chip_gen: v7x
topology: tpu7x:2x2x1
jax: 0.10.0
libtpu: 0.0.40
codegen_flags: <defaults>
</compile_context>

<pallas_src>
import math

import jax
import jax.numpy as jnp
from jax.experimental import pallas as pl
from jax.experimental.pallas import tpu as pltpu


def _round_up(n, m):
    return ((n + m - 1) // m) * m


def stacked_ae_kernel(
    x_ref,
    we1, be1, we2, be2, we3, be3,            # encoder params (bf16 W, f32 b)
    wd3, bd3, wd2, bd2, wd1, bd1,            # decoder params (bf16 W, f32 b)
    enc_ref, dec_ref, s1_ref, s2_ref, s3_ref,
):
    tm = x_ref.shape[0]
    f32 = jnp.float32
    bf16 = jnp.bfloat16

    def dense(h, w_ref, b_ref, relu):
        # bf16 x bf16 -> f32 accumulation on the MXU; bias/ReLU in f32.
        y = jnp.dot(h.astype(bf16), w_ref[...], preferred_element_type=f32)
        y = y + b_ref[...].astype(f32)
        if relu:
            y = jnp.maximum(y, 0.0)
        return y

    x = x_ref[...].astype(f32)

    # ---- encoder: e1 -> relu -> e2 -> relu -> e3 ----
    h1 = dense(x, we1, be1, True)            # [TM, 512]
    h2 = dense(h1, we2, be2, True)           # [TM, 256]
    enc = dense(h2, we3, be3, False)         # [TM, 128]

    # ---- decoder head: d3 -> relu ----
    g1 = dense(enc, wd3, bd3, True)          # [TM, 256]

    # ---- fused d2: decoder (g1) and stack2 (h2) share wd2, both + ReLU ----
    y2 = dense(jnp.concatenate([g1, h2], axis=0), wd2, bd2, True)   # [2*TM, 512]
    g2 = y2[:tm]                             # decoder branch
    s2h = y2[tm:]                            # stack2 branch

    # ---- fused d1: decoder (g2), stack1 (h1), stack2 (s2h) share wd1, no ReLU ----
    y1 = dense(jnp.concatenate([g2, h1, s2h], axis=0), wd1, bd1, False)  # [3*TM, in]
    dec = y1[:tm]
    s1 = y1[tm:2 * tm]
    s2 = y1[2 * tm:]

    enc_ref[...] = enc.astype(enc_ref.dtype)
    dec_ref[...] = dec.astype(dec_ref.dtype)
    s1_ref[...] = s1.astype(s1_ref.dtype)
    s2_ref[...] = s2.astype(s2_ref.dtype)
    s3_ref[...] = dec.astype(s3_ref.dtype)   # stack3 == encoder->decoder == decoded


def init_params(key, input_size, embedding_dim, dtype=jnp.float32):
    """Mirrors stackedAE.initialization (weights ~ N(0, 0.01)).

    Weights are stored pre-transposed as [in_features, out_features] so the
    kernel computes y = x @ W + b == PyTorch's x @ weight.T + bias.
    """
    dims = {
        "e1": (input_size, 500),
        "e2": (500, 200),
        "e3": (200, embedding_dim),
        "d3": (embedding_dim, 200),
        "d2": (200, 500),
        "d1": (500, input_size),
    }
    params = {}
    for i, (name, (din, dout)) in enumerate(dims.items()):
        kw, kb = jax.random.split(jax.random.fold_in(key, i))
        params[f"w_{name}"] = (0.01 * jax.random.normal(kw, (din, dout))).astype(dtype)
        params[f"b_{name}"] = (0.01 * jax.random.normal(kb, (1, dout))).astype(dtype)
    return params


def _pad2(a, rows, cols, dtype):
    return jnp.pad(a, ((0, rows - a.shape[0]), (0, cols - a.shape[1]))).astype(dtype)


@jax.jit
def stacked_ae_forward(x, params):
    B, input_size = x.shape
    embedding_dim = params["w_e3"].shape[1]
    dtype = x.dtype

    # Lane-aligned (padded) feature sizes.
    in_p = _round_up(input_size, 128)
    h1_p = _round_up(500, 128)            # 512
    h2_p = _round_up(200, 128)            # 256
    emb_p = _round_up(embedding_dim, 128)

    # Batch tile: fill the MXU for large batches, stay minimal for tiny ones.
    tm = min(256, _round_up(B, 8))
    B_p = _round_up(B, tm)
    grid = (B_p // tm,)

    # Zero-pad operands (exact) and cast weights to bf16 (f32 accum in-kernel).
    wdt = jnp.bfloat16
    f32 = jnp.float32
    operands = (
        _pad2(x, B_p, in_p, dtype),
        _pad2(params["w_e1"], in_p, h1_p, wdt), _pad2(params["b_e1"], 1, h1_p, f32),
        _pad2(params["w_e2"], h1_p, h2_p, wdt), _pad2(params["b_e2"], 1, h2_p, f32),
        _pad2(params["w_e3"], h2_p, emb_p, wdt), _pad2(params["b_e3"], 1, emb_p, f32),
        _pad2(params["w_d3"], emb_p, h2_p, wdt), _pad2(params["b_d3"], 1, h2_p, f32),
        _pad2(params["w_d2"], h2_p, h1_p, wdt), _pad2(params["b_d2"], 1, h1_p, f32),
        _pad2(params["w_d1"], h1_p, in_p, wdt), _pad2(params["b_d1"], 1, in_p, f32),
    )

    # x / outputs tiled over batch; weights & biases full-block with constant
    # index_maps -> VMEM-resident across every grid step.
    in_specs = [pl.BlockSpec((tm, in_p), lambda i: (i, 0))]
    in_specs += [pl.BlockSpec(a.shape, lambda i: (0, 0)) for a in operands[1:]]

    out_shapes = (
        jax.ShapeDtypeStruct((B_p, emb_p), dtype),   # encoded
        jax.ShapeDtypeStruct((B_p, in_p), dtype),    # decoded
        jax.ShapeDtypeStruct((B_p, in_p), dtype),    # stack1
        jax.ShapeDtypeStruct((B_p, in_p), dtype),    # stack2
        jax.ShapeDtypeStruct((B_p, in_p), dtype),    # stack3
    )
    out_specs = tuple(
        pl.BlockSpec((tm, s.shape[1]), lambda i: (i, 0)) for s in out_shapes
    )

    # Advisory cost estimate (8 effective matmuls after wd1/wd2 fusion).
    flops = 2 * B_p * (
        in_p * h1_p + h1_p * h2_p + h2_p * emb_p + emb_p * h2_p
        + 2 * h2_p * h1_p + 3 * h1_p * in_p
    )
    bytes_accessed = sum(a.size * a.dtype.itemsize for a in operands)
    bytes_accessed += sum(
        math.prod(s.shape) * jnp.dtype(s.dtype).itemsize for s in out_shapes
    )

    enc, dec, s1, s2, s3 = pl.pallas_call(
        stacked_ae_kernel,
        out_shape=out_shapes,
        grid=grid,
        in_specs=in_specs,
        out_specs=out_specs,
        compiler_params=pltpu.CompilerParams(
            dimension_semantics=("parallel",),
            vmem_limit_bytes=32 << 20,
        ),
        cost_estimate=pl.CostEstimate(
            flops=flops, transcendentals=0, bytes_accessed=bytes_accessed
        ),
    )(*operands)

    return (
        enc[:B, :embedding_dim],
        dec[:B, :input_size],
        [s1[:B, :input_size], s2[:B, :input_size], s3[:B, :input_size]],
    )


def _reference_forward(x, p):
    """Pure-JAX reference mirroring the PyTorch module (eval-mode dropout),
    with the same bf16-matmul / f32-accumulate numerics as the kernel."""
    bf16 = jnp.bfloat16

    def dense(h, w, b, relu):
        y = jnp.dot(h.astype(bf16), w.astype(bf16),
                    preferred_element_type=jnp.float32) + b
        return jnp.maximum(y, 0.0) if relu else y

    h1 = dense(x, p["w_e1"], p["b_e1"], True)
    h2 = dense(h1, p["w_e2"], p["b_e2"], True)
    enc = dense(h2, p["w_e3"], p["b_e3"], False)
    g1 = dense(enc, p["w_d3"], p["b_d3"], True)
    g2 = dense(g1, p["w_d2"], p["b_d2"], True)
    dec = dense(g2, p["w_d1"], p["b_d1"], False)
    s1 = dense(h1, p["w_d1"], p["b_d1"], False)
    s2 = dense(dense(h2, p["w_d2"], p["b_d2"], True), p["w_d1"], p["b_d1"], False)
    return enc, dec, [s1, s2, dec]


if __name__ == "__main__":
    key = jax.random.PRNGKey(0)
    batch = 8
    input_size = 256
    embedding_dim = 32

    kx, kp = jax.random.split(key)
    x = jax.random.normal(kx, (batch, input_size), dtype=jnp.float32)
    params = init_params(kp, input_size, embedding_dim)

    enc, dec, stacks = stacked_ae_forward(x, params)
    jax.block_until_ready((enc, dec, stacks))

    # Correctness check against a pure-JAX reference (bf16 matmul tolerance).
    renc, rdec, rstacks = _reference_forward(x, params)
    assert enc.shape == (batch, embedding_dim)
    assert dec.shape == (batch, input_size)
    assert all(s.shape == (batch, input_size) for s in stacks)
    assert jnp.allclose(enc, renc, atol=1e-2, rtol=1e-2)
    assert jnp.allclose(dec, rdec, atol=1e-2, rtol=1e-2)
    for a, b in zip(stacks, rstacks):
        assert jnp.allclose(a, b, atol=1e-2, rtol=1e-2)

    print("KERNEL_OK")
</pallas_src>

<mosaic_0001>
module attributes {stable_mosaic.version = 11 : i64} {
  func.func @stacked_ae_kernel(%arg0: i32, %arg1: memref<8x256xf32, #tpu.memory_space<vmem>>, %arg2: memref<256x512xbf16, #tpu.memory_space<vmem>>, %arg3: memref<1x512xf32, #tpu.memory_space<vmem>>, %arg4: memref<512x256xbf16, #tpu.memory_space<vmem>>, %arg5: memref<1x256xf32, #tpu.memory_space<vmem>>, %arg6: memref<256x128xbf16, #tpu.memory_space<vmem>>, %arg7: memref<1x128xf32, #tpu.memory_space<vmem>>, %arg8: memref<128x256xbf16, #tpu.memory_space<vmem>>, %arg9: memref<1x256xf32, #tpu.memory_space<vmem>>, %arg10: memref<256x512xbf16, #tpu.memory_space<vmem>>, %arg11: memref<1x512xf32, #tpu.memory_space<vmem>>, %arg12: memref<512x256xbf16, #tpu.memory_space<vmem>>, %arg13: memref<1x256xf32, #tpu.memory_space<vmem>>, %arg14: memref<8x128xf32, #tpu.memory_space<vmem>>, %arg15: memref<8x256xf32, #tpu.memory_space<vmem>>, %arg16: memref<8x256xf32, #tpu.memory_space<vmem>>, %arg17: memref<8x256xf32, #tpu.memory_space<vmem>>, %arg18: memref<8x256xf32, #tpu.memory_space<vmem>>) attributes {dimension_semantics = [#tpu.dimension_semantics<parallel>], iteration_bounds = array<i64: 1>, scalar_prefetch = 0 : i64, scratch_operands = 0 : i64, tpu.core_type = #tpu.core_type<tc>, window_params = [{transform_indices = @transform_0, window_bounds = array<i64: 8, 256>}, {pipeline_mode = #tpu.pipeline_mode<synchronous>, transform_indices = @transform_1, window_bounds = array<i64: 256, 512>}, {pipeline_mode = #tpu.pipeline_mode<synchronous>, transform_indices = @transform_2, window_bounds = array<i64: 1, 512>}, {pipeline_mode = #tpu.pipeline_mode<synchronous>, transform_indices = @transform_3, window_bounds = array<i64: 512, 256>}, {pipeline_mode = #tpu.pipeline_mode<synchronous>, transform_indices = @transform_4, window_bounds = array<i64: 1, 256>}, {pipeline_mode = #tpu.pipeline_mode<synchronous>, transform_indices = @transform_5, window_bounds = array<i64: 256, 128>}, {pipeline_mode = #tpu.pipeline_mode<synchronous>, transform_indices = @transform_6, window_bounds = array<i64: 1, 128>}, {pipeline_mode = #tpu.pipeline_mode<synchronous>, transform_indices = @transform_7, window_bounds = array<i64: 128, 256>}, {pipeline_mode = #tpu.pipeline_mode<synchronous>, transform_indices = @transform_8, window_bounds = array<i64: 1, 256>}, {pipeline_mode = #tpu.pipeline_mode<synchronous>, transform_indices = @transform_9, window_bounds = array<i64: 256, 512>}, {pipeline_mode = #tpu.pipeline_mode<synchronous>, transform_indices = @transform_10, window_bounds = array<i64: 1, 512>}, {pipeline_mode = #tpu.pipeline_mode<synchronous>, transform_indices = @transform_11, window_bounds = array<i64: 512, 256>}, {pipeline_mode = #tpu.pipeline_mode<synchronous>, transform_indices = @transform_12, window_bounds = array<i64: 1, 256>}, {transform_indices = @transform_13, window_bounds = array<i64: 8, 128>}, {transform_indices = @transform_14, window_bounds = array<i64: 8, 256>}, {transform_indices = @transform_15, window_bounds = array<i64: 8, 256>}, {transform_indices = @transform_16, window_bounds = array<i64: 8, 256>}, {transform_indices = @transform_17, window_bounds = array<i64: 8, 256>}]} {
    %c0 = arith.constant 0 : index
    %c0_0 = arith.constant 0 : index
    %0 = vector.load %arg1[%c0, %c0_0] : memref<8x256xf32, #tpu.memory_space<vmem>>, vector<8x256xf32>
    %1 = arith.truncf %0 : vector<8x256xf32> to vector<8x256xbf16>
    %c0_1 = arith.constant 0 : index
    %c0_2 = arith.constant 0 : index
    %2 = vector.load %arg2[%c0_1, %c0_2] : memref<256x512xbf16, #tpu.memory_space<vmem>>, vector<256x512xbf16>
    %cst = arith.constant dense<0.000000e+00> : vector<8x512xf32>
    %3 = tpu.matmul %1, %2, %cst {dimension_numbers = #tpu.dot_dimension_numbers<[1], [0], [0], [1], [0, 0, 1, 1], [], []>} : vector<8x256xbf16>, vector<256x512xbf16>, vector<8x512xf32> -> vector<8x512xf32>
    %c0_3 = arith.constant 0 : index
    %c0_4 = arith.constant 0 : index
    %4 = vector.load %arg3[%c0_3, %c0_4] : memref<1x512xf32, #tpu.memory_space<vmem>>, vector<1x512xf32>
    %5 = vector.broadcast %4 : vector<1x512xf32> to vector<8x512xf32>
    %6 = arith.addf %3, %5 : vector<8x512xf32>
    %cst_5 = arith.constant 0.000000e+00 : f32
    %7 = vector.broadcast %cst_5 : f32 to vector<8x512xf32>
    %8 = arith.maximumf %6, %7 : vector<8x512xf32>
    %9 = arith.truncf %8 : vector<8x512xf32> to vector<8x512xbf16>
    %c0_6 = arith.constant 0 : index
    %c0_7 = arith.constant 0 : index
    %10 = vector.load %arg4[%c0_6, %c0_7] : memref<512x256xbf16, #tpu.memory_space<vmem>>, vector<512x256xbf16>
    %cst_8 = arith.constant dense<0.000000e+00> : vector<8x256xf32>
    %11 = tpu.matmul %9, %10, %cst_8 {dimension_numbers = #tpu.dot_dimension_numbers<[1], [0], [0], [1], [0, 0, 1, 1], [], []>} : vector<8x512xbf16>, vector<512x256xbf16>, vector<8x256xf32> -> vector<8x256xf32>
    %c0_9 = arith.constant 0 : index
    %c0_10 = arith.constant 0 : index
    %12 = vector.load %arg5[%c0_9, %c0_10] : memref<1x256xf32, #tpu.memory_space<vmem>>, vector<1x256xf32>
    %13 = vector.broadcast %12 : vector<1x256xf32> to vector<8x256xf32>
    %14 = arith.addf %11, %13 : vector<8x256xf32>
    %cst_11 = arith.constant 0.000000e+00 : f32
    %15 = vector.broadcast %cst_11 : f32 to vector<8x256xf32>
    %16 = arith.maximumf %14, %15 : vector<8x256xf32>
    %17 = arith.truncf %16 : vector<8x256xf32> to vector<8x256xbf16>
    %c0_12 = arith.constant 0 : index
    %c0_13 = arith.constant 0 : index
    %18 = vector.load %arg6[%c0_12, %c0_13] : memref<256x128xbf16, #tpu.memory_space<vmem>>, vector<256x128xbf16>
    %cst_14 = arith.constant dense<0.000000e+00> : vector<8x128xf32>
    %19 = tpu.matmul %17, %18, %cst_14 {dimension_numbers = #tpu.dot_dimension_numbers<[1], [0], [0], [1], [0, 0, 1, 1], [], []>} : vector<8x256xbf16>, vector<256x128xbf16>, vector<8x128xf32> -> vector<8x128xf32>
    %c0_15 = arith.constant 0 : index
    %c0_16 = arith.constant 0 : index
    %20 = vector.load %arg7[%c0_15, %c0_16] : memref<1x128xf32, #tpu.memory_space<vmem>>, vector<1x128xf32>
    %21 = vector.broadcast %20 : vector<1x128xf32> to vector<8x128xf32>
    %22 = arith.addf %19, %21 : vector<8x128xf32>
    %23 = arith.truncf %22 : vector<8x128xf32> to vector<8x128xbf16>
    %c0_17 = arith.constant 0 : index
    %c0_18 = arith.constant 0 : index
    %24 = vector.load %arg8[%c0_17, %c0_18] : memref<128x256xbf16, #tpu.memory_space<vmem>>, vector<128x256xbf16>
    %cst_19 = arith.constant dense<0.000000e+00> : vector<8x256xf32>
    %25 = tpu.matmul %23, %24, %cst_19 {dimension_numbers = #tpu.dot_dimension_numbers<[1], [0], [0], [1], [0, 0, 1, 1], [], []>} : vector<8x128xbf16>, vector<128x256xbf16>, vector<8x256xf32> -> vector<8x256xf32>
    %c0_20 = arith.constant 0 : index
    %c0_21 = arith.constant 0 : index
    %26 = vector.load %arg9[%c0_20, %c0_21] : memref<1x256xf32, #tpu.memory_space<vmem>>, vector<1x256xf32>
    %27 = vector.broadcast %26 : vector<1x256xf32> to vector<8x256xf32>
    %28 = arith.addf %25, %27 : vector<8x256xf32>
    %cst_22 = arith.constant 0.000000e+00 : f32
    %29 = vector.broadcast %cst_22 : f32 to vector<8x256xf32>
    %30 = arith.maximumf %28, %29 : vector<8x256xf32>
    %31 = tpu.concatenate %30, %16 in 0 : vector<8x256xf32>, vector<8x256xf32> -> vector<16x256xf32>
    %32 = arith.truncf %31 : vector<16x256xf32> to vector<16x256xbf16>
    %c0_23 = arith.constant 0 : index
    %c0_24 = arith.constant 0 : index
    %33 = vector.load %arg10[%c0_23, %c0_24] : memref<256x512xbf16, #tpu.memory_space<vmem>>, vector<256x512xbf16>
    %cst_25 = arith.constant dense<0.000000e+00> : vector<16x512xf32>
    %34 = tpu.matmul %32, %33, %cst_25 {dimension_numbers = #tpu.dot_dimension_numbers<[1], [0], [0], [1], [0, 0, 1, 1], [], []>} : vector<16x256xbf16>, vector<256x512xbf16>, vector<16x512xf32> -> vector<16x512xf32>
    %c0_26 = arith.constant 0 : index
    %c0_27 = arith.constant 0 : index
    %35 = vector.load %arg11[%c0_26, %c0_27] : memref<1x512xf32, #tpu.memory_space<vmem>>, vector<1x512xf32>
    %36 = vector.broadcast %35 : vector<1x512xf32> to vector<16x512xf32>
    %37 = arith.addf %34, %36 : vector<16x512xf32>
    %cst_28 = arith.constant 0.000000e+00 : f32
    %38 = vector.broadcast %cst_28 : f32 to vector<16x512xf32>
    %39 = arith.maximumf %37, %38 : vector<16x512xf32>
    %40 = vector.extract_strided_slice %39 {offsets = [0, 0], sizes = [8, 512], strides = [1, 1]} : vector<16x512xf32> to vector<8x512xf32>
    %41 = vector.extract_strided_slice %39 {offsets = [8, 0], sizes = [8, 512], strides = [1, 1]} : vector<16x512xf32> to vector<8x512xf32>
    %42 = tpu.concatenate %40, %8, %41 in 0 : vector<8x512xf32>, vector<8x512xf32>, vector<8x512xf32> -> vector<24x512xf32>
    %43 = arith.truncf %42 : vector<24x512xf32> to vector<24x512xbf16>
    %c0_29 = arith.constant 0 : index
    %c0_30 = arith.constant 0 : index
    %44 = vector.load %arg12[%c0_29, %c0_30] : memref<512x256xbf16, #tpu.memory_space<vmem>>, vector<512x256xbf16>
    %cst_31 = arith.constant dense<0.000000e+00> : vector<24x256xf32>
    %45 = tpu.matmul %43, %44, %cst_31 {dimension_numbers = #tpu.dot_dimension_numbers<[1], [0], [0], [1], [0, 0, 1, 1], [], []>} : vector<24x512xbf16>, vector<512x256xbf16>, vector<24x256xf32> -> vector<24x256xf32>
    %c0_32 = arith.constant 0 : index
    %c0_33 = arith.constant 0 : index
    %46 = vector.load %arg13[%c0_32, %c0_33] : memref<1x256xf32, #tpu.memory_space<vmem>>, vector<1x256xf32>
    %47 = vector.broadcast %46 : vector<1x256xf32> to vector<24x256xf32>
    %48 = arith.addf %45, %47 : vector<24x256xf32>
    %49 = vector.extract_strided_slice %48 {offsets = [0, 0], sizes = [8, 256], strides = [1, 1]} : vector<24x256xf32> to vector<8x256xf32>
    %50 = vector.extract_strided_slice %48 {offsets = [8, 0], sizes = [8, 256], strides = [1, 1]} : vector<24x256xf32> to vector<8x256xf32>
    %51 = vector.extract_strided_slice %48 {offsets = [16, 0], sizes = [8, 256], strides = [1, 1]} : vector<24x256xf32> to vector<8x256xf32>
    %c0_34 = arith.constant 0 : index
    %c0_35 = arith.constant 0 : index
    %52 = vector.load %arg14[%c0_34, %c0_35] : memref<8x128xf32, #tpu.memory_space<vmem>>, vector<8x128xf32>
    tpu.vector_store %arg14[%c0_34, %c0_35], %22 {strides = array<i32>} : memref<8x128xf32, #tpu.memory_space<vmem>>, vector<8x128xf32>,
    %c0_36 = arith.constant 0 : index
    %c0_37 = arith.constant 0 : index
    %53 = vector.load %arg15[%c0_36, %c0_37] : memref<8x256xf32, #tpu.memory_space<vmem>>, vector<8x256xf32>
    tpu.vector_store %arg15[%c0_36, %c0_37], %49 {strides = array<i32>} : memref<8x256xf32, #tpu.memory_space<vmem>>, vector<8x256xf32>,
    %c0_38 = arith.constant 0 : index
    %c0_39 = arith.constant 0 : index
    %54 = vector.load %arg16[%c0_38, %c0_39] : memref<8x256xf32, #tpu.memory_space<vmem>>, vector<8x256xf32>
    tpu.vector_store %arg16[%c0_38, %c0_39], %50 {strides = array<i32>} : memref<8x256xf32, #tpu.memory_space<vmem>>, vector<8x256xf32>,
    %c0_40 = arith.constant 0 : index
    %c0_41 = arith.constant 0 : index
    %55 = vector.load %arg17[%c0_40, %c0_41] : memref<8x256xf32, #tpu.memory_space<vmem>>, vector<8x256xf32>
    tpu.vector_store %arg17[%c0_40, %c0_41], %51 {strides = array<i32>} : memref<8x256xf32, #tpu.memory_space<vmem>>, vector<8x256xf32>,
    %c0_42 = arith.constant 0 : index
    %c0_43 = arith.constant 0 : index
    %56 = vector.load %arg18[%c0_42, %c0_43] : memref<8x256xf32, #tpu.memory_space<vmem>>, vector<8x256xf32>
    tpu.vector_store %arg18[%c0_42, %c0_43], %49 {strides = array<i32>} : memref<8x256xf32, #tpu.memory_space<vmem>>, vector<8x256xf32>,
    return
  }
  func.func @transform_0(%arg0: i32) -> (i32, i32) {
    %c0_i32 = arith.constant 0 : i32
    %c0_i32_0 = arith.constant 0 : i32
    return %arg0, %c0_i32 : i32, i32
  }
  func.func @transform_1(%arg0: i32) -> (i32, i32) {
    %c0_i32 = arith.constant 0 : i32
    %c0_i32_0 = arith.constant 0 : i32
    %c0_i32_1 = arith.constant 0 : i32
    return %c0_i32, %c0_i32_0 : i32, i32
  }
  func.func @transform_2(%arg0: i32) -> (i32, i32) {
    %c0_i32 = arith.constant 0 : i32
    %c0_i32_0 = arith.constant 0 : i32
    %c0_i32_1 = arith.constant 0 : i32
    return %c0_i32, %c0_i32_0 : i32, i32
  }
  func.func @transform_3(%arg0: i32) -> (i32, i32) {
    %c0_i32 = arith.constant 0 : i32
    %c0_i32_0 = arith.constant 0 : i32
    %c0_i32_1 = arith.constant 0 : i32
    return %c0_i32, %c0_i32_0 : i32, i32
  }
  func.func @transform_4(%arg0: i32) -> (i32, i32) {
    %c0_i32 = arith.constant 0 : i32
    %c0_i32_0 = arith.constant 0 : i32
    %c0_i32_1 = arith.constant 0 : i32
    return %c0_i32, %c0_i32_0 : i32, i32
  }
  func.func @transform_5(%arg0: i32) -> (i32, i32) {
    %c0_i32 = arith.constant 0 : i32
    %c0_i32_0 = arith.constant 0 : i32
    %c0_i32_1 = arith.constant 0 : i32
    return %c0_i32, %c0_i32_0 : i32, i32
  }
  func.func @transform_6(%arg0: i32) -> (i32, i32) {
    %c0_i32 = arith.constant 0 : i32
    %c0_i32_0 = arith.constant 0 : i32
    %c0_i32_1 = arith.constant 0 : i32
    return %c0_i32, %c0_i32_0 : i32, i32
  }
  func.func @transform_7(%arg0: i32) -> (i32, i32) {
    %c0_i32 = arith.constant 0 : i32
    %c0_i32_0 = arith.constant 0 : i32
    %c0_i32_1 = arith.constant 0 : i32
    return %c0_i32, %c0_i32_0 : i32, i32
  }
  func.func @transform_8(%arg0: i32) -> (i32, i32) {
    %c0_i32 = arith.constant 0 : i32
    %c0_i32_0 = arith.constant 0 : i32
    %c0_i32_1 = arith.constant 0 : i32
    return %c0_i32, %c0_i32_0 : i32, i32
  }
  func.func @transform_9(%arg0: i32) -> (i32, i32) {
    %c0_i32 = arith.constant 0 : i32
    %c0_i32_0 = arith.constant 0 : i32
    %c0_i32_1 = arith.constant 0 : i32
    return %c0_i32, %c0_i32_0 : i32, i32
  }
  func.func @transform_10(%arg0: i32) -> (i32, i32) {
    %c0_i32 = arith.constant 0 : i32
    %c0_i32_0 = arith.constant 0 : i32
    %c0_i32_1 = arith.constant 0 : i32
    return %c0_i32, %c0_i32_0 : i32, i32
  }
  func.func @transform_11(%arg0: i32) -> (i32, i32) {
    %c0_i32 = arith.constant 0 : i32
    %c0_i32_0 = arith.constant 0 : i32
    %c0_i32_1 = arith.constant 0 : i32
    return %c0_i32, %c0_i32_0 : i32, i32
  }
  func.func @transform_12(%arg0: i32) -> (i32, i32) {
    %c0_i32 = arith.constant 0 : i32
    %c0_i32_0 = arith.constant 0 : i32
    %c0_i32_1 = arith.constant 0 : i32
    return %c0_i32, %c0_i32_0 : i32, i32
  }
  func.func @transform_13(%arg0: i32) -> (i32, i32) {
    %c0_i32 = arith.constant 0 : i32
    %c0_i32_0 = arith.constant 0 : i32
    return %arg0, %c0_i32 : i32, i32
  }
  func.func @transform_14(%arg0: i32) -> (i32, i32) {
    %c0_i32 = arith.constant 0 : i32
    %c0_i32_0 = arith.constant 0 : i32
    return %arg0, %c0_i32 : i32, i32
  }
  func.func @transform_15(%arg0: i32) -> (i32, i32) {
    %c0_i32 = arith.constant 0 : i32
    %c0_i32_0 = arith.constant 0 : i32
    return %arg0, %c0_i32 : i32, i32
  }
  func.func @transform_16(%arg0: i32) -> (i32, i32) {
    %c0_i32 = arith.constant 0 : i32
    %c0_i32_0 = arith.constant 0 : i32
    return %arg0, %c0_i32 : i32, i32
  }
  func.func @transform_17(%arg0: i32) -> (i32, i32) {
    %c0_i32 = arith.constant 0 : i32
    %c0_i32_0 = arith.constant 0 : i32
    return %arg0, %c0_i32 : i32, i32
  }
}

</mosaic_0001>

<llo_original>
// kernel: stacked_ae_forward.1
$region0: #{stacked_ae_forward.1}
  #allocation0 [shape = 'u32[]', space=smem, size = 0x4, offset = 0x4, fixed_abs, tag = 'smem constant byte address 0x4 - core index']
  #allocation1 [shape = 'u32[144,128]{1,0:T(1,128)}', space=vmem, size = 0x12000, scoped, tag = 'internal scratch']
  %s0 = inlined_call_operand.vmem [shape: f32[8,256], index: 0, kind: input, shape index: {}]
  %s1 = inlined_call_operand.vmem [shape: bf16[256,512], index: 1, kind: input, shape index: {}]
  %s2 = inlined_call_operand.vmem [shape: f32[1,512], index: 2, kind: input, shape index: {}]
  %s3 = inlined_call_operand.vmem [shape: bf16[512,256], index: 3, kind: input, shape index: {}]
  %s4 = inlined_call_operand.vmem [shape: f32[1,256], index: 4, kind: input, shape index: {}]
  %s5 = inlined_call_operand.vmem [shape: bf16[256,128], index: 5, kind: input, shape index: {}]
  %s6 = inlined_call_operand.vmem [shape: f32[1,128], index: 6, kind: input, shape index: {}]
  %s7 = inlined_call_operand.vmem [shape: bf16[128,256], index: 7, kind: input, shape index: {}]
  %s8 = inlined_call_operand.vmem [shape: f32[1,256], index: 8, kind: input, shape index: {}]
  %s9 = inlined_call_operand.vmem [shape: bf16[256,512], index: 9, kind: input, shape index: {}]
  %s10 = inlined_call_operand.vmem [shape: f32[1,512], index: 10, kind: input, shape index: {}]
  %s11 = inlined_call_operand.vmem [shape: bf16[512,256], index: 11, kind: input, shape index: {}]
  %s12 = inlined_call_operand.vmem [shape: f32[1,256], index: 12, kind: input, shape index: {}]
  %s13 = inlined_call_operand.hbm [shape: f32[8,128], index: 13, kind: output, shape index: {0}]
  %s14 = inlined_call_operand.hbm [shape: f32[8,256], index: 14, kind: output, shape index: {1}]
  %s15 = inlined_call_operand.hbm [shape: f32[8,256], index: 15, kind: output, shape index: {2}]
  %s16 = inlined_call_operand.hbm [shape: f32[8,256], index: 16, kind: output, shape index: {3}]
  %s17 = inlined_call_operand.hbm [shape: f32[8,256], index: 17, kind: output, shape index: {4}]
  %18 = xla_tuple %s13, %s14, %s15, %s16, %s17
  %s19 = sld [smem:[#allocation0]]
  $region94: #{stacked_ae_forward.1} parent=0
    _
  %s21 = ssub.s32 1, %s19
  %s22 = scalar_select 0, %s21, %s19
  $region1: #{stacked_ae_forward.1} parent=0
    #allocation2 [shape = 'u8[4096]{0}', space=vmem, size = 0x1000, scoped, tag = 'output window, operand 0, single buffered']
    #allocation3 [shape = 's32[1]{0}', space=sflag, size = 0x4, scoped, tag = 'scoped memory for stacked_ae_forward.1']
    #allocation4 [shape = 'u8[8192]{0}', space=vmem, size = 0x2000, scoped, tag = 'output window, operand 1, single buffered']
    #allocation5 [shape = 's32[1]{0}', space=sflag, size = 0x4, scoped, tag = 'scoped memory for stacked_ae_forward.1']
    #allocation6 [shape = 'u8[8192]{0}', space=vmem, size = 0x2000, scoped, tag = 'output window, operand 2, single buffered']
    #allocation7 [shape = 'u8[8192]{0}', space=vmem, size = 0x2000, scoped, tag = 'output window, operand 3, single buffered']
    #allocation8 [shape = 's32[1]{0}', space=sflag, size = 0x4, scoped, tag = 'scoped memory for stacked_ae_forward.1']
    #allocation9 [shape = 'u8[8192]{0}', space=vmem, size = 0x2000, scoped, tag = 'output window, operand 4, single buffered']
    %23 = vsyncpa [#allocation3], 0
    %24 = vsyncpa [#allocation5], 0
    %25 = vsyncpa [#allocation8], 0
    // Predicated region
    $region2: #{stacked_ae_forward.1} parent=1 // pred_check
      _
    $region3: #{stacked_ae_forward.1} parent=1 // pred_check_branch
      %27 = sbr.rel (0) target = $region5
    $region4: #{stacked_ae_forward.1} parent=1 // pred_region
      _
    $region5: #{stacked_ae_forward.1} parent=1 // pred_fallthru
      _
    // Predicated region
    $region6: #{stacked_ae_forward.1} parent=1 // pred_check
      _
    $region7: #{stacked_ae_forward.1} parent=1 // pred_check_branch
      %29 = sbr.rel (0) target = $region9
    $region8: #{stacked_ae_forward.1} parent=1 // pred_region
      _
    $region9: #{stacked_ae_forward.1} parent=1 // pred_fallthru
      _
    // Predicated region
    $region10: #{stacked_ae_forward.1} parent=1 // pred_check
      _
    $region11: #{stacked_ae_forward.1} parent=1 // pred_check_branch
      %31 = sbr.rel (0) target = $region13
    $region12: #{stacked_ae_forward.1} parent=1 // pred_region
      _
    $region13: #{stacked_ae_forward.1} parent=1 // pred_fallthru
      _
    // Predicated region
    $region14: #{stacked_ae_forward.1} parent=1 // pred_check
      _
    $region15: #{stacked_ae_forward.1} parent=1 // pred_check_branch
      %33 = sbr.rel (0) target = $region17
    $region16: #{stacked_ae_forward.1} parent=1 // pred_region
      _
    $region17: #{stacked_ae_forward.1} parent=1 // pred_fallthru
      _
    // Predicated region
    $region18: #{stacked_ae_forward.1} parent=1 // pred_check
      _
    $region19: #{stacked_ae_forward.1} parent=1 // pred_check_branch
      %35 = sbr.rel (0) target = $region21
    $region20: #{stacked_ae_forward.1} parent=1 // pred_region
      _
    $region21: #{stacked_ae_forward.1} parent=1 // pred_fallthru
      _
    // Predicated region
    $region22: #{stacked_ae_forward.1} parent=1 // pred_check
      _
    $region23: #{stacked_ae_forward.1} parent=1 // pred_check_branch
      %37 = sbr.rel (0) target = $region25
    $region24: #{stacked_ae_forward.1} parent=1 // pred_region
      _
    $region25: #{stacked_ae_forward.1} parent=1 // pred_fallthru
      _
    // Predicated region
    $region26: #{stacked_ae_forward.1} parent=1 // pred_check
      _
    $region27: #{stacked_ae_forward.1} parent=1 // pred_check_branch
      %39 = sbr.rel (0) target = $region29
    $region28: #{stacked_ae_forward.1} parent=1 // pred_region
      _
    $region29: #{stacked_ae_forward.1} parent=1 // pred_fallthru
      _
    // Predicated region
    $region30: #{stacked_ae_forward.1} parent=1 // pred_check
      _
    $region31: #{stacked_ae_forward.1} parent=1 // pred_check_branch
      %41 = sbr.rel (0) target = $region33
    $region32: #{stacked_ae_forward.1} parent=1 // pred_region
      _
    $region33: #{stacked_ae_forward.1} parent=1 // pred_fallthru
      _
    // Predicated region
    $region34: #{stacked_ae_forward.1} parent=1 // pred_check
      _
    $region35: #{stacked_ae_forward.1} parent=1 // pred_check_branch
      %43 = sbr.rel (0) target = $region37
    $region36: #{stacked_ae_forward.1} parent=1 // pred_region
      _
    $region37: #{stacked_ae_forward.1} parent=1 // pred_fallthru
      _
    // Predicated region
    $region38: #{stacked_ae_forward.1} parent=1 // pred_check
      _
    $region39: #{stacked_ae_forward.1} parent=1 // pred_check_branch
      %45 = sbr.rel (0) target = $region41
    $region40: #{stacked_ae_forward.1} parent=1 // pred_region
      _
    $region41: #{stacked_ae_forward.1} parent=1 // pred_fallthru
      _
    // Predicated region
    $region42: #{stacked_ae_forward.1} parent=1 // pred_check
      _
    $region43: #{stacked_ae_forward.1} parent=1 // pred_check_branch
      %47 = sbr.rel (0) target = $region45
    $region44: #{stacked_ae_forward.1} parent=1 // pred_region
      _
    $region45: #{stacked_ae_forward.1} parent=1 // pred_fallthru
      _
    // Predicated region
    $region46: #{stacked_ae_forward.1} parent=1 // pred_check
      _
    $region47: #{stacked_ae_forward.1} parent=1 // pred_check_branch
      %49 = sbr.rel (0) target = $region49
    $region48: #{stacked_ae_forward.1} parent=1 // pred_region
      _
    $region49: #{stacked_ae_forward.1} parent=1 // pred_fallthru
      _
    // Predicated region
    $region50: #{stacked_ae_forward.1} parent=1 // pred_check
      _
    $region51: #{stacked_ae_forward.1} parent=1 // pred_check_branch
      %51 = sbr.rel (0) target = $region53
    $region52: #{stacked_ae_forward.1} parent=1 // pred_region
      _
    $region53: #{stacked_ae_forward.1} parent=1 // pred_fallthru
      _
    %v53 = vld [vmem:[%s0] sm:$0xff]
    %v54 = vld [vmem:[%s0 + $0x8] sm:$0xff]
    %v55 = vpack.c.bf16 %v53, %v53
    %v56 = vpack.c.bf16 %v54, %v54
    %v57 = vld [vmem:[%s1] sm:$0xff]
    %v58 = vld [vmem:[%s1 + $0x8] sm:$0xff]
    %v59 = vld [vmem:[%s1 + $0x10] sm:$0xff]
    %v60 = vld [vmem:[%s1 + $0x18] sm:$0xff]
    %v61 = vld [vmem:[%s1 + $0x20] sm:$0xff]
    %v62 = vld [vmem:[%s1 + $0x28] sm:$0xff]
    %v63 = vld [vmem:[%s1 + $0x30] sm:$0xff]
    %v64 = vld [vmem:[%s1 + $0x38] sm:$0xff]
    %v65 = vld [vmem:[%s1 + $0x40] sm:$0xff]
    %v66 = vld [vmem:[%s1 + $0x48] sm:$0xff]
    %v67 = vld [vmem:[%s1 + $0x50] sm:$0xff]
    %v68 = vld [vmem:[%s1 + $0x58] sm:$0xff]
    %v69 = vld [vmem:[%s1 + $0x60] sm:$0xff]
    %v70 = vld [vmem:[%s1 + $0x68] sm:$0xff]
    %v71 = vld [vmem:[%s1 + $0x70] sm:$0xff]
    %v72 = vld [vmem:[%s1 + $0x78] sm:$0xff]
    %v73 = vld [vmem:[%s1 + $0x80] sm:$0xff]
    %v74 = vld [vmem:[%s1 + $0x88] sm:$0xff]
    %v75 = vld [vmem:[%s1 + $0x90] sm:$0xff]
    %v76 = vld [vmem:[%s1 + $0x98] sm:$0xff]
    %v77 = vld [vmem:[%s1 + $0xa0] sm:$0xff]
    %v78 = vld [vmem:[%s1 + $0xa8] sm:$0xff]
    %v79 = vld [vmem:[%s1 + $0xb0] sm:$0xff]
    %v80 = vld [vmem:[%s1 + $0xb8] sm:$0xff]
    %v81 = vld [vmem:[%s1 + $0xc0] sm:$0xff]
    %v82 = vld [vmem:[%s1 + $0xc8] sm:$0xff]
    %v83 = vld [vmem:[%s1 + $0xd0] sm:$0xff]
    %v84 = vld [vmem:[%s1 + $0xd8] sm:$0xff]
    %v85 = vld [vmem:[%s1 + $0xe0] sm:$0xff]
    %v86 = vld [vmem:[%s1 + $0xe8] sm:$0xff]
    %v87 = vld [vmem:[%s1 + $0xf0] sm:$0xff]
    %v88 = vld [vmem:[%s1 + $0xf8] sm:$0xff]
    %v89 = vld [vmem:[%s1 + $0x100] sm:$0xff]
    %v90 = vld [vmem:[%s1 + $0x108] sm:$0xff]
    %v91 = vld [vmem:[%s1 + $0x110] sm:$0xff]
    %v92 = vld [vmem:[%s1 + $0x118] sm:$0xff]
    %v93 = vld [vmem:[%s1 + $0x120] sm:$0xff]
    %v94 = vld [vmem:[%s1 + $0x128] sm:$0xff]
    %v95 = vld [vmem:[%s1 + $0x130] sm:$0xff]
    %v96 = vld [vmem:[%s1 + $0x138] sm:$0xff]
    %v97 = vld [vmem:[%s1 + $0x140] sm:$0xff]
    %v98 = vld [vmem:[%s1 + $0x148] sm:$0xff]
    %v99 = vld [vmem:[%s1 + $0x150] sm:$0xff]
    %v100 = vld [vmem:[%s1 + $0x158] sm:$0xff]
    %v101 = vld [vmem:[%s1 + $0x160] sm:$0xff]
    %v102 = vld [vmem:[%s1 + $0x168] sm:$0xff]
    %v103 = vld [vmem:[%s1 + $0x170] sm:$0xff]
    %v104 = vld [vmem:[%s1 + $0x178] sm:$0xff]
    %v105 = vld [vmem:[%s1 + $0x180] sm:$0xff]
    %v106 = vld [vmem:[%s1 + $0x188] sm:$0xff]
    %v107 = vld [vmem:[%s1 + $0x190] sm:$0xff]
    %v108 = vld [vmem:[%s1 + $0x198] sm:$0xff]
    %v109 = vld [vmem:[%s1 + $0x1a0] sm:$0xff]
    %v110 = vld [vmem:[%s1 + $0x1a8] sm:$0xff]
    %v111 = vld [vmem:[%s1 + $0x1b0] sm:$0xff]
    %v112 = vld [vmem:[%s1 + $0x1b8] sm:$0xff]
    %v113 = vld [vmem:[%s1 + $0x1c0] sm:$0xff]
    %v114 = vld [vmem:[%s1 + $0x1c8] sm:$0xff]
    %v115 = vld [vmem:[%s1 + $0x1d0] sm:$0xff]
    %v116 = vld [vmem:[%s1 + $0x1d8] sm:$0xff]
    %v117 = vld [vmem:[%s1 + $0x1e0] sm:$0xff]
    %v118 = vld [vmem:[%s1 + $0x1e8] sm:$0xff]
    %v119 = vld [vmem:[%s1 + $0x1f0] sm:$0xff]
    %v120 = vld [vmem:[%s1 + $0x1f8] sm:$0xff]
    %v121 = vld [vmem:[%s2] sm:$0xf]
    %v123 = vlaneseq
    %v124 = vshrl.u32 %v123, 7
    %v125 = vsub.s32 0, %v124
    %v126 = vrot.slane %v121, %v125
    %v127 = vlaneseq
    %v128 = vshrl.u32 %v127, 7
    %v129 = vsub.s32 1, %v128
    %v130 = vrot.slane %v121, %v129
    %v131 = vlaneseq
    %v132 = vshrl.u32 %v131, 7
    %v133 = vsub.s32 2, %v132
    %v134 = vrot.slane %v121, %v133
    %v135 = vlaneseq
    %v136 = vshrl.u32 %v135, 7
    %v137 = vsub.s32 3, %v136
    %v138 = vrot.slane %v121, %v137
    %v207 = vunpack.c.l.b16 %v57
    %v208 = vunpack.c.h.b16 %v57
    %v209 = vunpack.c.l.b16 %v58
    %v210 = vunpack.c.h.b16 %v58
    %v211 = vunpack.c.l.b16 %v59
    %v212 = vunpack.c.h.b16 %v59
    %v213 = vunpack.c.l.b16 %v60
    %v214 = vunpack.c.h.b16 %v60
    %v215 = vunpack.c.l.b16 %v61
    %v216 = vunpack.c.h.b16 %v61
    %v217 = vunpack.c.l.b16 %v62
    %v218 = vunpack.c.h.b16 %v62
    %v219 = vunpack.c.l.b16 %v63
    %v220 = vunpack.c.h.b16 %v63
    %v221 = vunpack.c.l.b16 %v64
    %v222 = vunpack.c.h.b16 %v64
    %v223 = vunpack.c.l.b16 %v65
    %v224 = vunpack.c.h.b16 %v65
    %v225 = vunpack.c.l.b16 %v66
    %v226 = vunpack.c.h.b16 %v66
    %v227 = vunpack.c.l.b16 %v67
    %v228 = vunpack.c.h.b16 %v67
    %v229 = vunpack.c.l.b16 %v68
    %v230 = vunpack.c.h.b16 %v68
    %v231 = vunpack.c.l.b16 %v69
    %v232 = vunpack.c.h.b16 %v69
    %v233 = vunpack.c.l.b16 %v70
    %v234 = vunpack.c.h.b16 %v70
    %v235 = vunpack.c.l.b16 %v71
    %v236 = vunpack.c.h.b16 %v71
    %v237 = vunpack.c.l.b16 %v72
    %v238 = vunpack.c.h.b16 %v72
    %v239 = vunpack.c.l.b16 %v73
    %v240 = vunpack.c.h.b16 %v73
    %v241 = vunpack.c.l.b16 %v74
    %v242 = vunpack.c.h.b16 %v74
    %v243 = vunpack.c.l.b16 %v75
    %v244 = vunpack.c.h.b16 %v75
    %v245 = vunpack.c.l.b16 %v76
    %v246 = vunpack.c.h.b16 %v76
    %v247 = vunpack.c.l.b16 %v77
    %v248 = vunpack.c.h.b16 %v77
    %v249 = vunpack.c.l.b16 %v78
    %v250 = vunpack.c.h.b16 %v78
    %v251 = vunpack.c.l.b16 %v79
    %v252 = vunpack.c.h.b16 %v79
    %v253 = vunpack.c.l.b16 %v80
    %v254 = vunpack.c.h.b16 %v80
    %v255 = vunpack.c.l.b16 %v81
    %v256 = vunpack.c.h.b16 %v81
    %v257 = vunpack.c.l.b16 %v82
    %v258 = vunpack.c.h.b16 %v82
    %v259 = vunpack.c.l.b16 %v83
    %v260 = vunpack.c.h.b16 %v83
    %v261 = vunpack.c.l.b16 %v84
    %v262 = vunpack.c.h.b16 %v84
    %v263 = vunpack.c.l.b16 %v85
    %v264 = vunpack.c.h.b16 %v85
    %v265 = vunpack.c.l.b16 %v86
    %v266 = vunpack.c.h.b16 %v86
    %v267 = vunpack.c.l.b16 %v87
    %v268 = vunpack.c.h.b16 %v87
    %v269 = vunpack.c.l.b16 %v88
    %v270 = vunpack.c.h.b16 %v88
    %v271 = vunpack.c.l.b16 %v89
    %v272 = vunpack.c.h.b16 %v89
    %v273 = vunpack.c.l.b16 %v90
    %v274 = vunpack.c.h.b16 %v90
    %v275 = vunpack.c.l.b16 %v91
    %v276 = vunpack.c.h.b16 %v91
    %v277 = vunpack.c.l.b16 %v92
    %v278 = vunpack.c.h.b16 %v92
    %v279 = vunpack.c.l.b16 %v93
    %v280 = vunpack.c.h.b16 %v93
    %v281 = vunpack.c.l.b16 %v94
    %v282 = vunpack.c.h.b16 %v94
    %v283 = vunpack.c.l.b16 %v95
    %v284 = vunpack.c.h.b16 %v95
    %v285 = vunpack.c.l.b16 %v96
    %v286 = vunpack.c.h.b16 %v96
    %v287 = vunpack.c.l.b16 %v97
    %v288 = vunpack.c.h.b16 %v97
    %v289 = vunpack.c.l.b16 %v98
    %v290 = vunpack.c.h.b16 %v98
    %v291 = vunpack.c.l.b16 %v99
    %v292 = vunpack.c.h.b16 %v99
    %v293 = vunpack.c.l.b16 %v100
    %v294 = vunpack.c.h.b16 %v100
    %v295 = vunpack.c.l.b16 %v101
    %v296 = vunpack.c.h.b16 %v101
    %v297 = vunpack.c.l.b16 %v102
    %v298 = vunpack.c.h.b16 %v102
    %v299 = vunpack.c.l.b16 %v103
    %v300 = vunpack.c.h.b16 %v103
    %v301 = vunpack.c.l.b16 %v104
    %v302 = vunpack.c.h.b16 %v104
    %v303 = vunpack.c.l.b16 %v105
    %v304 = vunpack.c.h.b16 %v105
    %v305 = vunpack.c.l.b16 %v106
    %v306 = vunpack.c.h.b16 %v106
    %v307 = vunpack.c.l.b16 %v107
    %v308 = vunpack.c.h.b16 %v107
    %v309 = vunpack.c.l.b16 %v108
    %v310 = vunpack.c.h.b16 %v108
    %v311 = vunpack.c.l.b16 %v109
    %v312 = vunpack.c.h.b16 %v109
    %v313 = vunpack.c.l.b16 %v110
    %v314 = vunpack.c.h.b16 %v110
    %v315 = vunpack.c.l.b16 %v111
    %v316 = vunpack.c.h.b16 %v111
    %v317 = vunpack.c.l.b16 %v112
    %v318 = vunpack.c.h.b16 %v112
    %v319 = vunpack.c.l.b16 %v113
    %v320 = vunpack.c.h.b16 %v113
    %v321 = vunpack.c.l.b16 %v114
    %v322 = vunpack.c.h.b16 %v114
    %v323 = vunpack.c.l.b16 %v115
    %v324 = vunpack.c.h.b16 %v115
    %v325 = vunpack.c.l.b16 %v116
    %v326 = vunpack.c.h.b16 %v116
    %v327 = vunpack.c.l.b16 %v117
    %v328 = vunpack.c.h.b16 %v117
    %v329 = vunpack.c.l.b16 %v118
    %v330 = vunpack.c.h.b16 %v118
    %v331 = vunpack.c.l.b16 %v119
    %v332 = vunpack.c.h.b16 %v119
    %v333 = vunpack.c.l.b16 %v120
    %v334 = vunpack.c.h.b16 %v120
    %v335 = vpack.c.b16 %v211, %v207
    %v336 = vpack.c.b16 %v212, %v208
    %v337 = vpack.c.b16 %v213, %v209
    %v338 = vpack.c.b16 %v214, %v210
    %v339 = vpack.c.b16 %v219, %v215
    %v340 = vpack.c.b16 %v220, %v216
    %v341 = vpack.c.b16 %v221, %v217
    %v342 = vpack.c.b16 %v222, %v218
    %v343 = vpack.c.b16 %v227, %v223
    %v344 = vpack.c.b16 %v228, %v224
    %v345 = vpack.c.b16 %v229, %v225
    %v346 = vpack.c.b16 %v230, %v226
    %v347 = vpack.c.b16 %v235, %v231
    %v348 = vpack.c.b16 %v236, %v232
    %v349 = vpack.c.b16 %v237, %v233
    %v350 = vpack.c.b16 %v238, %v234
    %v351 = vpack.c.b16 %v243, %v239
    %v352 = vpack.c.b16 %v244, %v240
    %v353 = vpack.c.b16 %v245, %v241
    %v354 = vpack.c.b16 %v246, %v242
    %v355 = vpack.c.b16 %v251, %v247
    %v356 = vpack.c.b16 %v252, %v248
    %v357 = vpack.c.b16 %v253, %v249
    %v358 = vpack.c.b16 %v254, %v250
    %v359 = vpack.c.b16 %v259, %v255
    %v360 = vpack.c.b16 %v260, %v256
    %v361 = vpack.c.b16 %v261, %v257
    %v362 = vpack.c.b16 %v262, %v258
    %v363 = vpack.c.b16 %v267, %v263
    %v364 = vpack.c.b16 %v268, %v264
    %v365 = vpack.c.b16 %v269, %v265
    %v366 = vpack.c.b16 %v270, %v266
    %v367 = vpack.c.b16 %v275, %v271
    %v368 = vpack.c.b16 %v276, %v272
    %v369 = vpack.c.b16 %v277, %v273
    %v370 = vpack.c.b16 %v278, %v274
    %v371 = vpack.c.b16 %v283, %v279
    %v372 = vpack.c.b16 %v284, %v280
    %v373 = vpack.c.b16 %v285, %v281
    %v374 = vpack.c.b16 %v286, %v282
    %v375 = vpack.c.b16 %v291, %v287
    %v376 = vpack.c.b16 %v292, %v288
    %v377 = vpack.c.b16 %v293, %v289
    %v378 = vpack.c.b16 %v294, %v290
    %v379 = vpack.c.b16 %v299, %v295
    %v380 = vpack.c.b16 %v300, %v296
    %v381 = vpack.c.b16 %v301, %v297
    %v382 = vpack.c.b16 %v302, %v298
    %v383 = vpack.c.b16 %v307, %v303
    %v384 = vpack.c.b16 %v308, %v304
    %v385 = vpack.c.b16 %v309, %v305
    %v386 = vpack.c.b16 %v310, %v306
    %v387 = vpack.c.b16 %v315, %v311
    %v388 = vpack.c.b16 %v316, %v312
    %v389 = vpack.c.b16 %v317, %v313
    %v390 = vpack.c.b16 %v318, %v314
    %v391 = vpack.c.b16 %v323, %v319
    %v392 = vpack.c.b16 %v324, %v320
    %v393 = vpack.c.b16 %v325, %v321
    %v394 = vpack.c.b16 %v326, %v322
    %v395 = vpack.c.b16 %v331, %v327
    %v396 = vpack.c.b16 %v332, %v328
    %v397 = vpack.c.b16 %v333, %v329
    %v398 = vpack.c.b16 %v334, %v330
    %463 = vmatprep.subr.bf16.mxu0 %v336
    %464 = vmatpush1.bf16.msra.mxu0 %v335
    %465 = vmatprep.subr.bf16.mxu0 %v340
    %466 = vmatpush1.bf16.msra.mxu0 %v339
    %467 = vmatprep.subr.bf16.mxu0 %v344
    %468 = vmatpush1.bf16.msra.mxu0 %v343
    %469 = vmatprep.subr.bf16.mxu0 %v348
    %470 = vmatpush1.bf16.msra.mxu0 %v347
    %471 = vmatprep.subr.bf16.mxu0 %v352
    %472 = vmatpush1.bf16.msra.mxu0 %v351
    %473 = vmatprep.subr.bf16.mxu0 %v356
    %474 = vmatpush1.bf16.msra.mxu0 %v355
    %475 = vmatprep.subr.bf16.mxu0 %v360
    %476 = vmatpush1.bf16.msra.mxu0 %v359
    %477 = vmatprep.subr.bf16.mxu0 %v364
    %478 = vmatpush1.bf16.msra.mxu0 %v363
    %479 = vmatprep.subr.bf16.mxu0 %v368
    %480 = vmatpush1.bf16.msra.mxu0 %v367
    %481 = vmatprep.subr.bf16.mxu0 %v372
    %482 = vmatpush1.bf16.msra.mxu0 %v371
    %483 = vmatprep.subr.bf16.mxu0 %v376
    %484 = vmatpush1.bf16.msra.mxu0 %v375
    %485 = vmatprep.subr.bf16.mxu0 %v380
    %486 = vmatpush1.bf16.msra.mxu0 %v379
    %487 = vmatprep.subr.bf16.mxu0 %v384
    %488 = vmatpush1.bf16.msra.mxu0 %v383
    %489 = vmatprep.subr.bf16.mxu0 %v388
    %490 = vmatpush1.bf16.msra.mxu0 %v387
    %491 = vmatprep.subr.bf16.mxu0 %v392
    %492 = vmatpush1.bf16.msra.mxu0 %v391
    %493 = vmatprep.subr.bf16.mxu0 %v396
    %494 = vmatpush1.bf16.msra.mxu0 %v395
    %495 = vmatprep.mubr.bf16.mxu0 %v56
    %496 = vmatmul.mubr.bf16.gmra.mrb[0].mxu0 %v55
    %v497 = vpop.f32.mrb[0].mxu0
    %v498 = vadd.f32 %v126, %v497
    %v499 = vpop.f32.mrb[0].mxu0
    %v500 = vadd.f32 %v130, %v499
    %v501 = vpop.f32.mrb[0].mxu0
    %v502 = vpop.f32.mrb[0].mxu0
    %503 = vdwg.mxu0
    %504 = vmatprep.subr.bf16.mxu0 %v338
    %505 = vmatpush1.bf16.msra.mxu0 %v337
    %506 = vmatprep.subr.bf16.mxu0 %v342
    %507 = vmatpush1.bf16.msra.mxu0 %v341
    %508 = vmatprep.subr.bf16.mxu0 %v346
    %509 = vmatpush1.bf16.msra.mxu0 %v345
    %510 = vmatprep.subr.bf16.mxu0 %v350
    %511 = vmatpush1.bf16.msra.mxu0 %v349
    %512 = vmatprep.subr.bf16.mxu0 %v354
    %513 = vmatpush1.bf16.msra.mxu0 %v353
    %514 = vmatprep.subr.bf16.mxu0 %v358
    %515 = vmatpush1.bf16.msra.mxu0 %v357
    %516 = vmatprep.subr.bf16.mxu0 %v362
    %517 = vmatpush1.bf16.msra.mxu0 %v361
    %518 = vmatprep.subr.bf16.mxu0 %v366
    %519 = vmatpush1.bf16.msra.mxu0 %v365
    %520 = vmatprep.subr.bf16.mxu0 %v370
    %521 = vmatpush1.bf16.msra.mxu0 %v369
    %522 = vmatprep.subr.bf16.mxu0 %v374
    %523 = vmatpush1.bf16.msra.mxu0 %v373
    %524 = vmatprep.subr.bf16.mxu0 %v378
    %525 = vmatpush1.bf16.msra.mxu0 %v377
    %526 = vmatprep.subr.bf16.mxu0 %v382
    %527 = vmatpush1.bf16.msra.mxu0 %v381
    %528 = vmatprep.subr.bf16.mxu0 %v386
    %529 = vmatpush1.bf16.msra.mxu0 %v385
    %530 = vmatprep.subr.bf16.mxu0 %v390
    %531 = vmatpush1.bf16.msra.mxu0 %v389
    %532 = vmatprep.subr.bf16.mxu0 %v394
    %533 = vmatpush1.bf16.msra.mxu0 %v393
    %534 = vmatprep.subr.bf16.mxu0 %v398
    %535 = vmatpush1.bf16.msra.mxu0 %v397
    %536 = vmatprep.mubr.bf16.mxu0 %v56
    %537 = vmatmul.mubr.bf16.gmra.mrb[0].mxu0 %v55
    %v538 = vpop.f32.mrb[0].mxu0
    %v539 = vadd.f32 %v134, %v538
    %v540 = vpop.f32.mrb[0].mxu0
    %v541 = vadd.f32 %v138, %v540
    %v542 = vpop.f32.mrb[0].mxu0
    %v543 = vpop.f32.mrb[0].mxu0
    %544 = vdwg.mxu0
    %v545 = vmax.f32 %v498, 0.0
    %v546 = vmax.f32 %v500, 0.0
    %v547 = vmax.f32 %v539, 0.0
    %v548 = vmax.f32 %v541, 0.0
    %v549 = vpack.c.bf16 %v545, %v545
    %v550 = vpack.c.bf16 %v546, %v546
    %v551 = vpack.c.bf16 %v547, %v547
    %v552 = vpack.c.bf16 %v548, %v548
    %v553 = vld [vmem:[%s3] sm:$0xff]
    %v554 = vld [vmem:[%s3 + $0x8] sm:$0xff]
    %v555 = vld [vmem:[%s3 + $0x10] sm:$0xff]
    %v556 = vld [vmem:[%s3 + $0x18] sm:$0xff]
    %v557 = vld [vmem:[%s3 + $0x20] sm:$0xff]
    %v558 = vld [vmem:[%s3 + $0x28] sm:$0xff]
    %v559 = vld [vmem:[%s3 + $0x30] sm:$0xff]
    %v560 = vld [vmem:[%s3 + $0x38] sm:$0xff]
    %v561 = vld [vmem:[%s3 + $0x40] sm:$0xff]
    %v562 = vld [vmem:[%s3 + $0x48] sm:$0xff]
    %v563 = vld [vmem:[%s3 + $0x50] sm:$0xff]
    %v564 = vld [vmem:[%s3 + $0x58] sm:$0xff]
    %v565 = vld [vmem:[%s3 + $0x60] sm:$0xff]
    %v566 = vld [vmem:[%s3 + $0x68] sm:$0xff]
    %v567 = vld [vmem:[%s3 + $0x70] sm:$0xff]
    %v568 = vld [vmem:[%s3 + $0x78] sm:$0xff]
    %v569 = vld [vmem:[%s3 + $0x80] sm:$0xff]
    %v570 = vld [vmem:[%s3 + $0x88] sm:$0xff]
    %v571 = vld [vmem:[%s3 + $0x90] sm:$0xff]
    %v572 = vld [vmem:[%s3 + $0x98] sm:$0xff]
    %v573 = vld [vmem:[%s3 + $0xa0] sm:$0xff]
    %v574 = vld [vmem:[%s3 + $0xa8] sm:$0xff]
    %v575 = vld [vmem:[%s3 + $0xb0] sm:$0xff]
    %v576 = vld [vmem:[%s3 + $0xb8] sm:$0xff]
    %v577 = vld [vmem:[%s3 + $0xc0] sm:$0xff]
    %v578 = vld [vmem:[%s3 + $0xc8] sm:$0xff]
    %v579 = vld [vmem:[%s3 + $0xd0] sm:$0xff]
    %v580 = vld [vmem:[%s3 + $0xd8] sm:$0xff]
    %v581 = vld [vmem:[%s3 + $0xe0] sm:$0xff]
    %v582 = vld [vmem:[%s3 + $0xe8] sm:$0xff]
    %v583 = vld [vmem:[%s3 + $0xf0] sm:$0xff]
    %v584 = vld [vmem:[%s3 + $0xf8] sm:$0xff]
    %v585 = vld [vmem:[%s3 + $0x100] sm:$0xff]
    %v586 = vld [vmem:[%s3 + $0x108] sm:$0xff]
    %v587 = vld [vmem:[%s3 + $0x110] sm:$0xff]
    %v588 = vld [vmem:[%s3 + $0x118] sm:$0xff]
    %v589 = vld [vmem:[%s3 + $0x120] sm:$0xff]
    %v590 = vld [vmem:[%s3 + $0x128] sm:$0xff]
    %v591 = vld [vmem:[%s3 + $0x130] sm:$0xff]
    %v592 = vld [vmem:[%s3 + $0x138] sm:$0xff]
    %v593 = vld [vmem:[%s3 + $0x140] sm:$0xff]
    %v594 = vld [vmem:[%s3 + $0x148] sm:$0xff]
    %v595 = vld [vmem:[%s3 + $0x150] sm:$0xff]
    %v596 = vld [vmem:[%s3 + $0x158] sm:$0xff]
    %v597 = vld [vmem:[%s3 + $0x160] sm:$0xff]
    %v598 = vld [vmem:[%s3 + $0x168] sm:$0xff]
    %v599 = vld [vmem:[%s3 + $0x170] sm:$0xff]
    %v600 = vld [vmem:[%s3 + $0x178] sm:$0xff]
    %v601 = vld [vmem:[%s3 + $0x180] sm:$0xff]
    %v602 = vld [vmem:[%s3 + $0x188] sm:$0xff]
    %v603 = vld [vmem:[%s3 + $0x190] sm:$0xff]
    %v604 = vld [vmem:[%s3 + $0x198] sm:$0xff]
    %v605 = vld [vmem:[%s3 + $0x1a0] sm:$0xff]
    %v606 = vld [vmem:[%s3 + $0x1a8] sm:$0xff]
    %v607 = vld [vmem:[%s3 + $0x1b0] sm:$0xff]
    %v608 = vld [vmem:[%s3 + $0x1b8] sm:$0xff]
    %v609 = vld [vmem:[%s3 + $0x1c0] sm:$0xff]
    %v610 = vld [vmem:[%s3 + $0x1c8] sm:$0xff]
    %v611 = vld [vmem:[%s3 + $0x1d0] sm:$0xff]
    %v612 = vld [vmem:[%s3 + $0x1d8] sm:$0xff]
    %v613 = vld [vmem:[%s3 + $0x1e0] sm:$0xff]
    %v614 = vld [vmem:[%s3 + $0x1e8] sm:$0xff]
    %v615 = vld [vmem:[%s3 + $0x1f0] sm:$0xff]
    %v616 = vld [vmem:[%s3 + $0x1f8] sm:$0xff]
    %v617 = vld [vmem:[%s4] sm:$0x3]
    %v619 = vlaneseq
    %v620 = vshrl.u32 %v619, 7
    %v621 = vsub.s32 0, %v620
    %v622 = vrot.slane %v617, %v621
    %v623 = vlaneseq
    %v624 = vshrl.u32 %v623, 7
    %v625 = vsub.s32 1, %v624
    %v626 = vrot.slane %v617, %v625
    %v693 = vunpack.c.l.b16 %v553
    %v694 = vunpack.c.h.b16 %v553
    %v695 = vunpack.c.l.b16 %v554
    %v696 = vunpack.c.h.b16 %v554
    %v697 = vunpack.c.l.b16 %v555
    %v698 = vunpack.c.h.b16 %v555
    %v699 = vunpack.c.l.b16 %v556
    %v700 = vunpack.c.h.b16 %v556
    %v701 = vunpack.c.l.b16 %v557
    %v702 = vunpack.c.h.b16 %v557
    %v703 = vunpack.c.l.b16 %v558
    %v704 = vunpack.c.h.b16 %v558
    %v705 = vunpack.c.l.b16 %v559
    %v706 = vunpack.c.h.b16 %v559
    %v707 = vunpack.c.l.b16 %v560
    %v708 = vunpack.c.h.b16 %v560
    %v709 = vunpack.c.l.b16 %v561
    %v710 = vunpack.c.h.b16 %v561
    %v711 = vunpack.c.l.b16 %v562
    %v712 = vunpack.c.h.b16 %v562
    %v713 = vunpack.c.l.b16 %v563
    %v714 = vunpack.c.h.b16 %v563
    %v715 = vunpack.c.l.b16 %v564
    %v716 = vunpack.c.h.b16 %v564
    %v717 = vunpack.c.l.b16 %v565
    %v718 = vunpack.c.h.b16 %v565
    %v719 = vunpack.c.l.b16 %v566
    %v720 = vunpack.c.h.b16 %v566
    %v721 = vunpack.c.l.b16 %v567
    %v722 = vunpack.c.h.b16 %v567
    %v723 = vunpack.c.l.b16 %v568
    %v724 = vunpack.c.h.b16 %v568
    %v725 = vunpack.c.l.b16 %v569
    %v726 = vunpack.c.h.b16 %v569
    %v727 = vunpack.c.l.b16 %v570
    %v728 = vunpack.c.h.b16 %v570
    %v729 = vunpack.c.l.b16 %v571
    %v730 = vunpack.c.h.b16 %v571
    %v731 = vunpack.c.l.b16 %v572
    %v732 = vunpack.c.h.b16 %v572
    %v733 = vunpack.c.l.b16 %v573
    %v734 = vunpack.c.h.b16 %v573
    %v735 = vunpack.c.l.b16 %v574
    %v736 = vunpack.c.h.b16 %v574
    %v737 = vunpack.c.l.b16 %v575
    %v738 = vunpack.c.h.b16 %v575
    %v739 = vunpack.c.l.b16 %v576
    %v740 = vunpack.c.h.b16 %v576
    %v741 = vunpack.c.l.b16 %v577
    %v742 = vunpack.c.h.b16 %v577
    %v743 = vunpack.c.l.b16 %v578
    %v744 = vunpack.c.h.b16 %v578
    %v745 = vunpack.c.l.b16 %v579
    %v746 = vunpack.c.h.b16 %v579
    %v747 = vunpack.c.l.b16 %v580
    %v748 = vunpack.c.h.b16 %v580
    %v749 = vunpack.c.l.b16 %v581
    %v750 = vunpack.c.h.b16 %v581
    %v751 = vunpack.c.l.b16 %v582
    %v752 = vunpack.c.h.b16 %v582
    %v753 = vunpack.c.l.b16 %v583
    %v754 = vunpack.c.h.b16 %v583
    %v755 = vunpack.c.l.b16 %v584
    %v756 = vunpack.c.h.b16 %v584
    %v757 = vunpack.c.l.b16 %v585
    %v758 = vunpack.c.h.b16 %v585
    %v759 = vunpack.c.l.b16 %v586
    %v760 = vunpack.c.h.b16 %v586
    %v761 = vunpack.c.l.b16 %v587
    %v762 = vunpack.c.h.b16 %v587
    %v763 = vunpack.c.l.b16 %v588
    %v764 = vunpack.c.h.b16 %v588
    %v765 = vunpack.c.l.b16 %v589
    %v766 = vunpack.c.h.b16 %v589
    %v767 = vunpack.c.l.b16 %v590
    %v768 = vunpack.c.h.b16 %v590
    %v769 = vunpack.c.l.b16 %v591
    %v770 = vunpack.c.h.b16 %v591
    %v771 = vunpack.c.l.b16 %v592
    %v772 = vunpack.c.h.b16 %v592
    %v773 = vunpack.c.l.b16 %v593
    %v774 = vunpack.c.h.b16 %v593
    %v775 = vunpack.c.l.b16 %v594
    %v776 = vunpack.c.h.b16 %v594
    %v777 = vunpack.c.l.b16 %v595
    %v778 = vunpack.c.h.b16 %v595
    %v779 = vunpack.c.l.b16 %v596
    %v780 = vunpack.c.h.b16 %v596
    %v781 = vunpack.c.l.b16 %v597
    %v782 = vunpack.c.h.b16 %v597
    %v783 = vunpack.c.l.b16 %v598
    %v784 = vunpack.c.h.b16 %v598
    %v785 = vunpack.c.l.b16 %v599
    %v786 = vunpack.c.h.b16 %v599
    %v787 = vunpack.c.l.b16 %v600
    %v788 = vunpack.c.h.b16 %v600
    %v789 = vunpack.c.l.b16 %v601
    %v790 = vunpack.c.h.b16 %v601
    %v791 = vunpack.c.l.b16 %v602
    %v792 = vunpack.c.h.b16 %v602
    %v793 = vunpack.c.l.b16 %v603
    %v794 = vunpack.c.h.b16 %v603
    %v795 = vunpack.c.l.b16 %v604
    %v796 = vunpack.c.h.b16 %v604
    %v797 = vunpack.c.l.b16 %v605
    %v798 = vunpack.c.h.b16 %v605
    %v799 = vunpack.c.l.b16 %v606
    %v800 = vunpack.c.h.b16 %v606
    %v801 = vunpack.c.l.b16 %v607
    %v802 = vunpack.c.h.b16 %v607
    %v803 = vunpack.c.l.b16 %v608
    %v804 = vunpack.c.h.b16 %v608
    %v805 = vunpack.c.l.b16 %v609
    %v806 = vunpack.c.h.b16 %v609
    %v807 = vunpack.c.l.b16 %v610
    %v808 = vunpack.c.h.b16 %v610
    %v809 = vunpack.c.l.b16 %v611
    %v810 = vunpack.c.h.b16 %v611
    %v811 = vunpack.c.l.b16 %v612
    %v812 = vunpack.c.h.b16 %v612
    %v813 = vunpack.c.l.b16 %v613
    %v814 = vunpack.c.h.b16 %v613
    %v815 = vunpack.c.l.b16 %v614
    %v816 = vunpack.c.h.b16 %v614
    %v817 = vunpack.c.l.b16 %v615
    %v818 = vunpack.c.h.b16 %v615
    %v819 = vunpack.c.l.b16 %v616
    %v820 = vunpack.c.h.b16 %v616
    %v821 = vpack.c.b16 %v695, %v693
    %v822 = vpack.c.b16 %v696, %v694
    %v823 = vpack.c.b16 %v699, %v697
    %v824 = vpack.c.b16 %v700, %v698
    %v825 = vpack.c.b16 %v703, %v701
    %v826 = vpack.c.b16 %v704, %v702
    %v827 = vpack.c.b16 %v707, %v705
    %v828 = vpack.c.b16 %v708, %v706
    %v829 = vpack.c.b16 %v711, %v709
    %v830 = vpack.c.b16 %v712, %v710
    %v831 = vpack.c.b16 %v715, %v713
    %v832 = vpack.c.b16 %v716, %v714
    %v833 = vpack.c.b16 %v719, %v717
    %v834 = vpack.c.b16 %v720, %v718
    %v835 = vpack.c.b16 %v723, %v721
    %v836 = vpack.c.b16 %v724, %v722
    %v837 = vpack.c.b16 %v727, %v725
    %v838 = vpack.c.b16 %v728, %v726
    %v839 = vpack.c.b16 %v731, %v729
    %v840 = vpack.c.b16 %v732, %v730
    %v841 = vpack.c.b16 %v735, %v733
    %v842 = vpack.c.b16 %v736, %v734
    %v843 = vpack.c.b16 %v739, %v737
    %v844 = vpack.c.b16 %v740, %v738
    %v845 = vpack.c.b16 %v743, %v741
    %v846 = vpack.c.b16 %v744, %v742
    %v847 = vpack.c.b16 %v747, %v745
    %v848 = vpack.c.b16 %v748, %v746
    %v849 = vpack.c.b16 %v751, %v749
    %v850 = vpack.c.b16 %v752, %v750
    %v851 = vpack.c.b16 %v755, %v753
    %v852 = vpack.c.b16 %v756, %v754
    %v853 = vpack.c.b16 %v759, %v757
    %v854 = vpack.c.b16 %v760, %v758
    %v855 = vpack.c.b16 %v763, %v761
    %v856 = vpack.c.b16 %v764, %v762
    %v857 = vpack.c.b16 %v767, %v765
    %v858 = vpack.c.b16 %v768, %v766
    %v859 = vpack.c.b16 %v771, %v769
    %v860 = vpack.c.b16 %v772, %v770
    %v861 = vpack.c.b16 %v775, %v773
    %v862 = vpack.c.b16 %v776, %v774
    %v863 = vpack.c.b16 %v779, %v777
    %v864 = vpack.c.b16 %v780, %v778
    %v865 = vpack.c.b16 %v783, %v781
    %v866 = vpack.c.b16 %v784, %v782
    %v867 = vpack.c.b16 %v787, %v785
    %v868 = vpack.c.b16 %v788, %v786
    %v869 = vpack.c.b16 %v791, %v789
    %v870 = vpack.c.b16 %v792, %v790
    %v871 = vpack.c.b16 %v795, %v793
    %v872 = vpack.c.b16 %v796, %v794
    %v873 = vpack.c.b16 %v799, %v797
    %v874 = vpack.c.b16 %v800, %v798
    %v875 = vpack.c.b16 %v803, %v801
    %v876 = vpack.c.b16 %v804, %v802
    %v877 = vpack.c.b16 %v807, %v805
    %v878 = vpack.c.b16 %v808, %v806
    %v879 = vpack.c.b16 %v811, %v809
    %v880 = vpack.c.b16 %v812, %v810
    %v881 = vpack.c.b16 %v815, %v813
    %v882 = vpack.c.b16 %v816, %v814
    %v883 = vpack.c.b16 %v819, %v817
    %v884 = vpack.c.b16 %v820, %v818
    %949 = vmatprep.subr.bf16.mxu0 %v822
    %950 = vmatpush1.bf16.msra.mxu0 %v821
    %951 = vmatprep.subr.bf16.mxu0 %v824
    %952 = vmatpush1.bf16.msra.mxu0 %v823
    %953 = vmatprep.subr.bf16.mxu0 %v826
    %954 = vmatpush1.bf16.msra.mxu0 %v825
    %955 = vmatprep.subr.bf16.mxu0 %v828
    %956 = vmatpush1.bf16.msra.mxu0 %v827
    %957 = vmatprep.subr.bf16.mxu0 %v830
    %958 = vmatpush1.bf16.msra.mxu0 %v829
    %959 = vmatprep.subr.bf16.mxu0 %v832
    %960 = vmatpush1.bf16.msra.mxu0 %v831
    %961 = vmatprep.subr.bf16.mxu0 %v834
    %962 = vmatpush1.bf16.msra.mxu0 %v833
    %963 = vmatprep.subr.bf16.mxu0 %v836
    %964 = vmatpush1.bf16.msra.mxu0 %v835
    %965 = vmatprep.subr.bf16.mxu0 %v838
    %966 = vmatpush1.bf16.msra.mxu0 %v837
    %967 = vmatprep.subr.bf16.mxu0 %v840
    %968 = vmatpush1.bf16.msra.mxu0 %v839
    %969 = vmatprep.subr.bf16.mxu0 %v842
    %970 = vmatpush1.bf16.msra.mxu0 %v841
    %971 = vmatprep.subr.bf16.mxu0 %v844
    %972 = vmatpush1.bf16.msra.mxu0 %v843
    %973 = vmatprep.subr.bf16.mxu0 %v846
    %974 = vmatpush1.bf16.msra.mxu0 %v845
    %975 = vmatprep.subr.bf16.mxu0 %v848
    %976 = vmatpush1.bf16.msra.mxu0 %v847
    %977 = vmatprep.subr.bf16.mxu0 %v850
    %978 = vmatpush1.bf16.msra.mxu0 %v849
    %979 = vmatprep.subr.bf16.mxu0 %v852
    %980 = vmatpush1.bf16.msra.mxu0 %v851
    %981 = vmatprep.mubr.bf16.mxu0 %v550
    %982 = vmatmul.mubr.bf16.gmra.mrb[0].mxu0 %v549
    %v983 = vpop.f32.mrb[0].mxu0
    %v984 = vadd.f32 %v622, %v983
    %v985 = vpop.f32.mrb[0].mxu0
    %v986 = vadd.f32 %v626, %v985
    %v987 = vpop.f32.mrb[0].mxu0
    %v988 = vpop.f32.mrb[0].mxu0
    %989 = vdwg.mxu0
    %990 = vmatprep.subr.bf16.mxu0 %v854
    %991 = vmatpush1.bf16.msra.mxu0 %v853
    %992 = vmatprep.subr.bf16.mxu0 %v856
    %993 = vmatpush1.bf16.msra.mxu0 %v855
    %994 = vmatprep.subr.bf16.mxu0 %v858
    %995 = vmatpush1.bf16.msra.mxu0 %v857
    %996 = vmatprep.subr.bf16.mxu0 %v860
    %997 = vmatpush1.bf16.msra.mxu0 %v859
    %998 = vmatprep.subr.bf16.mxu0 %v862
    %999 = vmatpush1.bf16.msra.mxu0 %v861
    %1000 = vmatprep.subr.bf16.mxu0 %v864
    %1001 = vmatpush1.bf16.msra.mxu0 %v863
    %1002 = vmatprep.subr.bf16.mxu0 %v866
    %1003 = vmatpush1.bf16.msra.mxu0 %v865
    %1004 = vmatprep.subr.bf16.mxu0 %v868
    %1005 = vmatpush1.bf16.msra.mxu0 %v867
    %1006 = vmatprep.subr.bf16.mxu0 %v870
    %1007 = vmatpush1.bf16.msra.mxu0 %v869
    %1008 = vmatprep.subr.bf16.mxu0 %v872
    %1009 = vmatpush1.bf16.msra.mxu0 %v871
    %1010 = vmatprep.subr.bf16.mxu0 %v874
    %1011 = vmatpush1.bf16.msra.mxu0 %v873
    %1012 = vmatprep.subr.bf16.mxu0 %v876
    %1013 = vmatpush1.bf16.msra.mxu0 %v875
    %1014 = vmatprep.subr.bf16.mxu0 %v878
    %1015 = vmatpush1.bf16.msra.mxu0 %v877
    %1016 = vmatprep.subr.bf16.mxu0 %v880
    %1017 = vmatpush1.bf16.msra.mxu0 %v879
    %1018 = vmatprep.subr.bf16.mxu0 %v882
    %1019 = vmatpush1.bf16.msra.mxu0 %v881
    %1020 = vmatprep.subr.bf16.mxu0 %v884
    %1021 = vmatpush1.bf16.msra.mxu0 %v883
    %1022 = vmatprep.mubr.bf16.mxu0 %v552
    %1023 = vmatmul.mubr.bf16.gmra.mrb[0].mxu0 %v551
    %v1024 = vpop.f32.mrb[0].mxu0
    %v1025 = vadd.f32 %v984, %v1024
    %v1026 = vpop.f32.mrb[0].mxu0
    %v1027 = vadd.f32 %v986, %v1026
    %v1028 = vpop.f32.mrb[0].mxu0
    %v1029 = vpop.f32.mrb[0].mxu0
    %1030 = vdwg.mxu0
    %v1031 = vmax.f32 %v1025, 0.0
    %v1032 = vmax.f32 %v1027, 0.0
    %v1033 = vpack.c.bf16 %v1031, %v1031
    %v1034 = vpack.c.bf16 %v1032, %v1032
    %v1035 = vld [vmem:[%s5] sm:$0xf]
    %v1036 = vld [vmem:[%s5 + $0x4] sm:$0xf]
    %v1037 = vld [vmem:[%s5 + $0x8] sm:$0xf]
    %v1038 = vld [vmem:[%s5 + $0xc] sm:$0xf]
    %v1039 = vld [vmem:[%s5 + $0x10] sm:$0xf]
    %v1040 = vld [vmem:[%s5 + $0x14] sm:$0xf]
    %v1041 = vld [vmem:[%s5 + $0x18] sm:$0xf]
    %v1042 = vld [vmem:[%s5 + $0x1c] sm:$0xf]
    %v1043 = vld [vmem:[%s5 + $0x20] sm:$0xf]
    %v1044 = vld [vmem:[%s5 + $0x24] sm:$0xf]
    %v1045 = vld [vmem:[%s5 + $0x28] sm:$0xf]
    %v1046 = vld [vmem:[%s5 + $0x2c] sm:$0xf]
    %v1047 = vld [vmem:[%s5 + $0x30] sm:$0xf]
    %v1048 = vld [vmem:[%s5 + $0x34] sm:$0xf]
    %v1049 = vld [vmem:[%s5 + $0x38] sm:$0xf]
    %v1050 = vld [vmem:[%s5 + $0x3c] sm:$0xf]
    %v1051 = vld [vmem:[%s5 + $0x40] sm:$0xf]
    %v1052 = vld [vmem:[%s5 + $0x44] sm:$0xf]
    %v1053 = vld [vmem:[%s5 + $0x48] sm:$0xf]
    %v1054 = vld [vmem:[%s5 + $0x4c] sm:$0xf]
    %v1055 = vld [vmem:[%s5 + $0x50] sm:$0xf]
    %v1056 = vld [vmem:[%s5 + $0x54] sm:$0xf]
    %v1057 = vld [vmem:[%s5 + $0x58] sm:$0xf]
    %v1058 = vld [vmem:[%s5 + $0x5c] sm:$0xf]
    %v1059 = vld [vmem:[%s5 + $0x60] sm:$0xf]
    %v1060 = vld [vmem:[%s5 + $0x64] sm:$0xf]
    %v1061 = vld [vmem:[%s5 + $0x68] sm:$0xf]
    %v1062 = vld [vmem:[%s5 + $0x6c] sm:$0xf]
    %v1063 = vld [vmem:[%s5 + $0x70] sm:$0xf]
    %v1064 = vld [vmem:[%s5 + $0x74] sm:$0xf]
    %v1065 = vld [vmem:[%s5 + $0x78] sm:$0xf]
    %v1066 = vld [vmem:[%s5 + $0x7c] sm:$0xf]
    %v1067 = vld [vmem:[%s6] sm:$0x1]
    %v1069 = vlaneseq
    %v1070 = vshrl.u32 %v1069, 7
    %v1071 = vsub.s32 0, %v1070
    %v1072 = vrot.slane %v1067, %v1071
    %v1106 = vunpack.c.l.b16 %v1035
    %v1107 = vunpack.c.l.b16 %v1036
    %v1108 = vunpack.c.l.b16 %v1037
    %v1109 = vunpack.c.l.b16 %v1038
    %v1110 = vunpack.c.l.b16 %v1039
    %v1111 = vunpack.c.l.b16 %v1040
    %v1112 = vunpack.c.l.b16 %v1041
    %v1113 = vunpack.c.l.b16 %v1042
    %v1114 = vunpack.c.l.b16 %v1043
    %v1115 = vunpack.c.l.b16 %v1044
    %v1116 = vunpack.c.l.b16 %v1045
    %v1117 = vunpack.c.l.b16 %v1046
    %v1118 = vunpack.c.l.b16 %v1047
    %v1119 = vunpack.c.l.b16 %v1048
    %v1120 = vunpack.c.l.b16 %v1049
    %v1121 = vunpack.c.l.b16 %v1050
    %v1122 = vunpack.c.l.b16 %v1051
    %v1123 = vunpack.c.l.b16 %v1052
    %v1124 = vunpack.c.l.b16 %v1053
    %v1125 = vunpack.c.l.b16 %v1054
    %v1126 = vunpack.c.l.b16 %v1055
    %v1127 = vunpack.c.l.b16 %v1056
    %v1128 = vunpack.c.l.b16 %v1057
    %v1129 = vunpack.c.l.b16 %v1058
    %v1130 = vunpack.c.l.b16 %v1059
    %v1131 = vunpack.c.l.b16 %v1060
    %v1132 = vunpack.c.l.b16 %v1061
    %v1133 = vunpack.c.l.b16 %v1062
    %v1134 = vunpack.c.l.b16 %v1063
    %v1135 = vunpack.c.l.b16 %v1064
    %v1136 = vunpack.c.l.b16 %v1065
    %v1137 = vunpack.c.l.b16 %v1066
    %v1138 = vpack.c.b16 %v1107, %v1106
    %v1139 = vpack.c.b16 %v1109, %v1108
    %v1140 = vpack.c.b16 %v1111, %v1110
    %v1141 = vpack.c.b16 %v1113, %v1112
    %v1142 = vpack.c.b16 %v1115, %v1114
    %v1143 = vpack.c.b16 %v1117, %v1116
    %v1144 = vpack.c.b16 %v1119, %v1118
    %v1145 = vpack.c.b16 %v1121, %v1120
    %v1146 = vpack.c.b16 %v1123, %v1122
    %v1147 = vpack.c.b16 %v1125, %v1124
    %v1148 = vpack.c.b16 %v1127, %v1126
    %v1149 = vpack.c.b16 %v1129, %v1128
    %v1150 = vpack.c.b16 %v1131, %v1130
    %v1151 = vpack.c.b16 %v1133, %v1132
    %v1152 = vpack.c.b16 %v1135, %v1134
    %v1153 = vpack.c.b16 %v1137, %v1136
    %1170 = vmatprep.subr.bf16.mxu0 0
    %1171 = vmatpush1.bf16.msra.mxu0 %v1138
    %1172 = vmatprep.subr.bf16.mxu0 0
    %1173 = vmatpush1.bf16.msra.mxu0 %v1139
    %1174 = vmatprep.subr.bf16.mxu0 0
    %1175 = vmatpush1.bf16.msra.mxu0 %v1140
    %1176 = vmatprep.subr.bf16.mxu0 0
    %1177 = vmatpush1.bf16.msra.mxu0 %v1141
    %1178 = vmatprep.subr.bf16.mxu0 0
    %1179 = vmatpush1.bf16.msra.mxu0 %v1142
    %1180 = vmatprep.subr.bf16.mxu0 0
    %1181 = vmatpush1.bf16.msra.mxu0 %v1143
    %1182 = vmatprep.subr.bf16.mxu0 0
    %1183 = vmatpush1.bf16.msra.mxu0 %v1144
    %1184 = vmatprep.subr.bf16.mxu0 0
    %1185 = vmatpush1.bf16.msra.mxu0 %v1145
    %1186 = vmatprep.subr.bf16.mxu0 0
    %1187 = vmatpush1.bf16.msra.mxu0 %v1146
    %1188 = vmatprep.subr.bf16.mxu0 0
    %1189 = vmatpush1.bf16.msra.mxu0 %v1147
    %1190 = vmatprep.subr.bf16.mxu0 0
    %1191 = vmatpush1.bf16.msra.mxu0 %v1148
    %1192 = vmatprep.subr.bf16.mxu0 0
    %1193 = vmatpush1.bf16.msra.mxu0 %v1149
    %1194 = vmatprep.subr.bf16.mxu0 0
    %1195 = vmatpush1.bf16.msra.mxu0 %v1150
    %1196 = vmatprep.subr.bf16.mxu0 0
    %1197 = vmatpush1.bf16.msra.mxu0 %v1151
    %1198 = vmatprep.subr.bf16.mxu0 0
    %1199 = vmatpush1.bf16.msra.mxu0 %v1152
    %1200 = vmatprep.subr.bf16.mxu0 0
    %1201 = vmatpush1.bf16.msra.mxu0 %v1153
    %1202 = vmatprep.mubr.bf16.mxu0 %v1034
    %1203 = vmatmul.mubr.bf16.gmra.mrb[0].mxu0 %v1033
    %v1204 = vpop.f32.mrb[0].mxu0
    %v1205 = vadd.f32 %v1072, %v1204
    %v1206 = vpop.f32.mrb[0].mxu0
    %v1207 = vpop.f32.mrb[0].mxu0
    %v1208 = vpop.f32.mrb[0].mxu0
    %1209 = vdwg.mxu0
    %v1210 = vpack.c.bf16 %v1205, %v1205
    %v1211 = vld [vmem:[%s7] sm:$0xff]
    %v1212 = vld [vmem:[%s7 + $0x8] sm:$0xff]
    %v1213 = vld [vmem:[%s7 + $0x10] sm:$0xff]
    %v1214 = vld [vmem:[%s7 + $0x18] sm:$0xff]
    %v1215 = vld [vmem:[%s7 + $0x20] sm:$0xff]
    %v1216 = vld [vmem:[%s7 + $0x28] sm:$0xff]
    %v1217 = vld [vmem:[%s7 + $0x30] sm:$0xff]
    %v1218 = vld [vmem:[%s7 + $0x38] sm:$0xff]
    %v1219 = vld [vmem:[%s7 + $0x40] sm:$0xff]
    %v1220 = vld [vmem:[%s7 + $0x48] sm:$0xff]
    %v1221 = vld [vmem:[%s7 + $0x50] sm:$0xff]
    %v1222 = vld [vmem:[%s7 + $0x58] sm:$0xff]
    %v1223 = vld [vmem:[%s7 + $0x60] sm:$0xff]
    %v1224 = vld [vmem:[%s7 + $0x68] sm:$0xff]
    %v1225 = vld [vmem:[%s7 + $0x70] sm:$0xff]
    %v1226 = vld [vmem:[%s7 + $0x78] sm:$0xff]
    %v1227 = vld [vmem:[%s8] sm:$0x3]
    %v1229 = vlaneseq
    %v1230 = vshrl.u32 %v1229, 7
    %v1231 = vsub.s32 0, %v1230
    %v1232 = vrot.slane %v1227, %v1231
    %v1233 = vlaneseq
    %v1234 = vshrl.u32 %v1233, 7
    %v1235 = vsub.s32 1, %v1234
    %v1236 = vrot.slane %v1227, %v1235
    %v1255 = vunpack.c.l.b16 %v1211
    %v1256 = vunpack.c.h.b16 %v1211
    %v1257 = vunpack.c.l.b16 %v1212
    %v1258 = vunpack.c.h.b16 %v1212
    %v1259 = vunpack.c.l.b16 %v1213
    %v1260 = vunpack.c.h.b16 %v1213
    %v1261 = vunpack.c.l.b16 %v1214
    %v1262 = vunpack.c.h.b16 %v1214
    %v1263 = vunpack.c.l.b16 %v1215
    %v1264 = vunpack.c.h.b16 %v1215
    %v1265 = vunpack.c.l.b16 %v1216
    %v1266 = vunpack.c.h.b16 %v1216
    %v1267 = vunpack.c.l.b16 %v1217
    %v1268 = vunpack.c.h.b16 %v1217
    %v1269 = vunpack.c.l.b16 %v1218
    %v1270 = vunpack.c.h.b16 %v1218
    %v1271 = vunpack.c.l.b16 %v1219
    %v1272 = vunpack.c.h.b16 %v1219
    %v1273 = vunpack.c.l.b16 %v1220
    %v1274 = vunpack.c.h.b16 %v1220
    %v1275 = vunpack.c.l.b16 %v1221
    %v1276 = vunpack.c.h.b16 %v1221
    %v1277 = vunpack.c.l.b16 %v1222
    %v1278 = vunpack.c.h.b16 %v1222
    %v1279 = vunpack.c.l.b16 %v1223
    %v1280 = vunpack.c.h.b16 %v1223
    %v1281 = vunpack.c.l.b16 %v1224
    %v1282 = vunpack.c.h.b16 %v1224
    %v1283 = vunpack.c.l.b16 %v1225
    %v1284 = vunpack.c.h.b16 %v1225
    %v1285 = vunpack.c.l.b16 %v1226
    %v1286 = vunpack.c.h.b16 %v1226
    %v1287 = vpack.c.b16 %v1257, %v1255
    %v1288 = vpack.c.b16 %v1258, %v1256
    %v1289 = vpack.c.b16 %v1261, %v1259
    %v1290 = vpack.c.b16 %v1262, %v1260
    %v1291 = vpack.c.b16 %v1265, %v1263
    %v1292 = vpack.c.b16 %v1266, %v1264
    %v1293 = vpack.c.b16 %v1269, %v1267
    %v1294 = vpack.c.b16 %v1270, %v1268
    %v1295 = vpack.c.b16 %v1273, %v1271
    %v1296 = vpack.c.b16 %v1274, %v1272
    %v1297 = vpack.c.b16 %v1277, %v1275
    %v1298 = vpack.c.b16 %v1278, %v1276
    %v1299 = vpack.c.b16 %v1281, %v1279
    %v1300 = vpack.c.b16 %v1282, %v1280
    %v1301 = vpack.c.b16 %v1285, %v1283
    %v1302 = vpack.c.b16 %v1286, %v1284
    %1319 = vmatprep.subr.bf16.mxu0 %v1288
    %1320 = vmatpush1.bf16.msra.mxu0 %v1287
    %1321 = vmatprep.subr.bf16.mxu0 %v1290
    %1322 = vmatpush1.bf16.msra.mxu0 %v1289
    %1323 = vmatprep.subr.bf16.mxu0 %v1292
    %1324 = vmatpush1.bf16.msra.mxu0 %v1291
    %1325 = vmatprep.subr.bf16.mxu0 %v1294
    %1326 = vmatpush1.bf16.msra.mxu0 %v1293
    %1327 = vmatprep.subr.bf16.mxu0 %v1296
    %1328 = vmatpush1.bf16.msra.mxu0 %v1295
    %1329 = vmatprep.subr.bf16.mxu0 %v1298
    %1330 = vmatpush1.bf16.msra.mxu0 %v1297
    %1331 = vmatprep.subr.bf16.mxu0 %v1300
    %1332 = vmatpush1.bf16.msra.mxu0 %v1299
    %1333 = vmatprep.subr.bf16.mxu0 %v1302
    %1334 = vmatpush1.bf16.msra.mxu0 %v1301
    %1335 = vmatprep.subr.bf16.mxu0 0
    %1336 = vmatpush1.bf16.msra.mxu0 0
    %1337 = vmatprep.subr.bf16.mxu0 0
    %1338 = vmatpush1.bf16.msra.mxu0 0
    %1339 = vmatprep.subr.bf16.mxu0 0
    %1340 = vmatpush1.bf16.msra.mxu0 0
    %1341 = vmatprep.subr.bf16.mxu0 0
    %1342 = vmatpush1.bf16.msra.mxu0 0
    %1343 = vmatprep.subr.bf16.mxu0 0
    %1344 = vmatpush1.bf16.msra.mxu0 0
    %1345 = vmatprep.subr.bf16.mxu0 0
    %1346 = vmatpush1.bf16.msra.mxu0 0
    %1347 = vmatprep.subr.bf16.mxu0 0
    %1348 = vmatpush1.bf16.msra.mxu0 0
    %1349 = vmatprep.subr.bf16.mxu0 0
    %1350 = vmatpush1.bf16.msra.mxu0 0
    %1351 = vmatprep.mubr.bf16.mxu0 0
    %1352 = vmatmul.mubr.bf16.gmra.mrb[0].mxu0 %v1210
    %v1353 = vpop.f32.mrb[0].mxu0
    %v1354 = vadd.f32 %v1232, %v1353
    %v1355 = vpop.f32.mrb[0].mxu0
    %v1356 = vadd.f32 %v1236, %v1355
    %v1357 = vpop.f32.mrb[0].mxu0
    %v1358 = vpop.f32.mrb[0].mxu0
    %1359 = vdwg.mxu0
    %v1360 = vmax.f32 %v1354, 0.0
    %v1361 = vmax.f32 %v1356, 0.0
    %v1362 = vpack.c.bf16 %v1031, %v1360
    %v1363 = vpack.c.bf16 %v1032, %v1361
    %v1364 = vld [vmem:[%s9] sm:$0xff]
    %v1365 = vld [vmem:[%s9 + $0x8] sm:$0xff]
    %v1366 = vld [vmem:[%s9 + $0x10] sm:$0xff]
    %v1367 = vld [vmem:[%s9 + $0x18] sm:$0xff]
    %v1368 = vld [vmem:[%s9 + $0x20] sm:$0xff]
    %v1369 = vld [vmem:[%s9 + $0x28] sm:$0xff]
    %v1370 = vld [vmem:[%s9 + $0x30] sm:$0xff]
    %v1371 = vld [vmem:[%s9 + $0x38] sm:$0xff]
    %v1372 = vld [vmem:[%s9 + $0x40] sm:$0xff]
    %v1373 = vld [vmem:[%s9 + $0x48] sm:$0xff]
    %v1374 = vld [vmem:[%s9 + $0x50] sm:$0xff]
    %v1375 = vld [vmem:[%s9 + $0x58] sm:$0xff]
    %v1376 = vld [vmem:[%s9 + $0x60] sm:$0xff]
    %v1377 = vld [vmem:[%s9 + $0x68] sm:$0xff]
    %v1378 = vld [vmem:[%s9 + $0x70] sm:$0xff]
    %v1379 = vld [vmem:[%s9 + $0x78] sm:$0xff]
    %v1380 = vld [vmem:[%s9 + $0x80] sm:$0xff]
    %v1381 = vld [vmem:[%s9 + $0x88] sm:$0xff]
    %v1382 = vld [vmem:[%s9 + $0x90] sm:$0xff]
    %v1383 = vld [vmem:[%s9 + $0x98] sm:$0xff]
    %v1384 = vld [vmem:[%s9 + $0xa0] sm:$0xff]
    %v1385 = vld [vmem:[%s9 + $0xa8] sm:$0xff]
    %v1386 = vld [vmem:[%s9 + $0xb0] sm:$0xff]
    %v1387 = vld [vmem:[%s9 + $0xb8] sm:$0xff]
    %v1388 = vld [vmem:[%s9 + $0xc0] sm:$0xff]
    %v1389 = vld [vmem:[%s9 + $0xc8] sm:$0xff]
    %v1390 = vld [vmem:[%s9 + $0xd0] sm:$0xff]
    %v1391 = vld [vmem:[%s9 + $0xd8] sm:$0xff]
    %v1392 = vld [vmem:[%s9 + $0xe0] sm:$0xff]
    %v1393 = vld [vmem:[%s9 + $0xe8] sm:$0xff]
    %v1394 = vld [vmem:[%s9 + $0xf0] sm:$0xff]
    %v1395 = vld [vmem:[%s9 + $0xf8] sm:$0xff]
    %v1396 = vld [vmem:[%s9 + $0x100] sm:$0xff]
    %v1397 = vld [vmem:[%s9 + $0x108] sm:$0xff]
    %v1398 = vld [vmem:[%s9 + $0x110] sm:$0xff]
    %v1399 = vld [vmem:[%s9 + $0x118] sm:$0xff]
    %v1400 = vld [vmem:[%s9 + $0x120] sm:$0xff]
    %v1401 = vld [vmem:[%s9 + $0x128] sm:$0xff]
    %v1402 = vld [vmem:[%s9 + $0x130] sm:$0xff]
    %v1403 = vld [vmem:[%s9 + $0x138] sm:$0xff]
    %v1404 = vld [vmem:[%s9 + $0x140] sm:$0xff]
    %v1405 = vld [vmem:[%s9 + $0x148] sm:$0xff]
    %v1406 = vld [vmem:[%s9 + $0x150] sm:$0xff]
    %v1407 = vld [vmem:[%s9 + $0x158] sm:$0xff]
    %v1408 = vld [vmem:[%s9 + $0x160] sm:$0xff]
    %v1409 = vld [vmem:[%s9 + $0x168] sm:$0xff]
    %v1410 = vld [vmem:[%s9 + $0x170] sm:$0xff]
    %v1411 = vld [vmem:[%s9 + $0x178] sm:$0xff]
    %v1412 = vld [vmem:[%s9 + $0x180] sm:$0xff]
    %v1413 = vld [vmem:[%s9 + $0x188] sm:$0xff]
    %v1414 = vld [vmem:[%s9 + $0x190] sm:$0xff]
    %v1415 = vld [vmem:[%s9 + $0x198] sm:$0xff]
    %v1416 = vld [vmem:[%s9 + $0x1a0] sm:$0xff]
    %v1417 = vld [vmem:[%s9 + $0x1a8] sm:$0xff]
    %v1418 = vld [vmem:[%s9 + $0x1b0] sm:$0xff]
    %v1419 = vld [vmem:[%s9 + $0x1b8] sm:$0xff]
    %v1420 = vld [vmem:[%s9 + $0x1c0] sm:$0xff]
    %v1421 = vld [vmem:[%s9 + $0x1c8] sm:$0xff]
    %v1422 = vld [vmem:[%s9 + $0x1d0] sm:$0xff]
    %v1423 = vld [vmem:[%s9 + $0x1d8] sm:$0xff]
    %v1424 = vld [vmem:[%s9 + $0x1e0] sm:$0xff]
    %v1425 = vld [vmem:[%s9 + $0x1e8] sm:$0xff]
    %v1426 = vld [vmem:[%s9 + $0x1f0] sm:$0xff]
    %v1427 = vld [vmem:[%s9 + $0x1f8] sm:$0xff]
    %v1428 = vld [vmem:[%s10] sm:$0xf]
    %v1430 = vlaneseq
    %v1431 = vshrl.u32 %v1430, 7
    %v1432 = vsub.s32 0, %v1431
    %v1433 = vrot.slane %v1428, %v1432
    %v1434 = vlaneseq
    %v1435 = vshrl.u32 %v1434, 7
    %v1436 = vsub.s32 1, %v1435
    %v1437 = vrot.slane %v1428, %v1436
    %v1438 = vlaneseq
    %v1439 = vshrl.u32 %v1438, 7
    %v1440 = vsub.s32 2, %v1439
    %v1441 = vrot.slane %v1428, %v1440
    %v1442 = vlaneseq
    %v1443 = vshrl.u32 %v1442, 7
    %v1444 = vsub.s32 3, %v1443
    %v1445 = vrot.slane %v1428, %v1444
    %v1514 = vunpack.c.l.b16 %v1364
    %v1515 = vunpack.c.h.b16 %v1364
    %v1516 = vunpack.c.l.b16 %v1365
    %v1517 = vunpack.c.h.b16 %v1365
    %v1518 = vunpack.c.l.b16 %v1366
    %v1519 = vunpack.c.h.b16 %v1366
    %v1520 = vunpack.c.l.b16 %v1367
    %v1521 = vunpack.c.h.b16 %v1367
    %v1522 = vunpack.c.l.b16 %v1368
    %v1523 = vunpack.c.h.b16 %v1368
    %v1524 = vunpack.c.l.b16 %v1369
    %v1525 = vunpack.c.h.b16 %v1369
    %v1526 = vunpack.c.l.b16 %v1370
    %v1527 = vunpack.c.h.b16 %v1370
    %v1528 = vunpack.c.l.b16 %v1371
    %v1529 = vunpack.c.h.b16 %v1371
    %v1530 = vunpack.c.l.b16 %v1372
    %v1531 = vunpack.c.h.b16 %v1372
    %v1532 = vunpack.c.l.b16 %v1373
    %v1533 = vunpack.c.h.b16 %v1373
    %v1534 = vunpack.c.l.b16 %v1374
    %v1535 = vunpack.c.h.b16 %v1374
    %v1536 = vunpack.c.l.b16 %v1375
    %v1537 = vunpack.c.h.b16 %v1375
    %v1538 = vunpack.c.l.b16 %v1376
    %v1539 = vunpack.c.h.b16 %v1376
    %v1540 = vunpack.c.l.b16 %v1377
    %v1541 = vunpack.c.h.b16 %v1377
    %v1542 = vunpack.c.l.b16 %v1378
    %v1543 = vunpack.c.h.b16 %v1378
    %v1544 = vunpack.c.l.b16 %v1379
    %v1545 = vunpack.c.h.b16 %v1379
    %v1546 = vunpack.c.l.b16 %v1380
    %v1547 = vunpack.c.h.b16 %v1380
    %v1548 = vunpack.c.l.b16 %v1381
    %v1549 = vunpack.c.h.b16 %v1381
    %v1550 = vunpack.c.l.b16 %v1382
    %v1551 = vunpack.c.h.b16 %v1382
    %v1552 = vunpack.c.l.b16 %v1383
    %v1553 = vunpack.c.h.b16 %v1383
    %v1554 = vunpack.c.l.b16 %v1384
    %v1555 = vunpack.c.h.b16 %v1384
    %v1556 = vunpack.c.l.b16 %v1385
    %v1557 = vunpack.c.h.b16 %v1385
    %v1558 = vunpack.c.l.b16 %v1386
    %v1559 = vunpack.c.h.b16 %v1386
    %v1560 = vunpack.c.l.b16 %v1387
    %v1561 = vunpack.c.h.b16 %v1387
    %v1562 = vunpack.c.l.b16 %v1388
    %v1563 = vunpack.c.h.b16 %v1388
    %v1564 = vunpack.c.l.b16 %v1389
    %v1565 = vunpack.c.h.b16 %v1389
    %v1566 = vunpack.c.l.b16 %v1390
    %v1567 = vunpack.c.h.b16 %v1390
    %v1568 = vunpack.c.l.b16 %v1391
    %v1569 = vunpack.c.h.b16 %v1391
    %v1570 = vunpack.c.l.b16 %v1392
    %v1571 = vunpack.c.h.b16 %v1392
    %v1572 = vunpack.c.l.b16 %v1393
    %v1573 = vunpack.c.h.b16 %v1393
    %v1574 = vunpack.c.l.b16 %v1394
    %v1575 = vunpack.c.h.b16 %v1394
    %v1576 = vunpack.c.l.b16 %v1395
    %v1577 = vunpack.c.h.b16 %v1395
    %v1578 = vunpack.c.l.b16 %v1396
    %v1579 = vunpack.c.h.b16 %v1396
    %v1580 = vunpack.c.l.b16 %v1397
    %v1581 = vunpack.c.h.b16 %v1397
    %v1582 = vunpack.c.l.b16 %v1398
    %v1583 = vunpack.c.h.b16 %v1398
    %v1584 = vunpack.c.l.b16 %v1399
    %v1585 = vunpack.c.h.b16 %v1399
    %v1586 = vunpack.c.l.b16 %v1400
    %v1587 = vunpack.c.h.b16 %v1400
    %v1588 = vunpack.c.l.b16 %v1401
    %v1589 = vunpack.c.h.b16 %v1401
    %v1590 = vunpack.c.l.b16 %v1402
    %v1591 = vunpack.c.h.b16 %v1402
    %v1592 = vunpack.c.l.b16 %v1403
    %v1593 = vunpack.c.h.b16 %v1403
    %v1594 = vunpack.c.l.b16 %v1404
    %v1595 = vunpack.c.h.b16 %v1404
    %v1596 = vunpack.c.l.b16 %v1405
    %v1597 = vunpack.c.h.b16 %v1405
    %v1598 = vunpack.c.l.b16 %v1406
    %v1599 = vunpack.c.h.b16 %v1406
    %v1600 = vunpack.c.l.b16 %v1407
    %v1601 = vunpack.c.h.b16 %v1407
    %v1602 = vunpack.c.l.b16 %v1408
    %v1603 = vunpack.c.h.b16 %v1408
    %v1604 = vunpack.c.l.b16 %v1409
    %v1605 = vunpack.c.h.b16 %v1409
    %v1606 = vunpack.c.l.b16 %v1410
    %v1607 = vunpack.c.h.b16 %v1410
    %v1608 = vunpack.c.l.b16 %v1411
    %v1609 = vunpack.c.h.b16 %v1411
    %v1610 = vunpack.c.l.b16 %v1412
    %v1611 = vunpack.c.h.b16 %v1412
    %v1612 = vunpack.c.l.b16 %v1413
    %v1613 = vunpack.c.h.b16 %v1413
    %v1614 = vunpack.c.l.b16 %v1414
    %v1615 = vunpack.c.h.b16 %v1414
    %v1616 = vunpack.c.l.b16 %v1415
    %v1617 = vunpack.c.h.b16 %v1415
    %v1618 = vunpack.c.l.b16 %v1416
    %v1619 = vunpack.c.h.b16 %v1416
    %v1620 = vunpack.c.l.b16 %v1417
    %v1621 = vunpack.c.h.b16 %v1417
    %v1622 = vunpack.c.l.b16 %v1418
    %v1623 = vunpack.c.h.b16 %v1418
    %v1624 = vunpack.c.l.b16 %v1419
    %v1625 = vunpack.c.h.b16 %v1419
    %v1626 = vunpack.c.l.b16 %v1420
    %v1627 = vunpack.c.h.b16 %v1420
    %v1628 = vunpack.c.l.b16 %v1421
    %v1629 = vunpack.c.h.b16 %v1421
    %v1630 = vunpack.c.l.b16 %v1422
    %v1631 = vunpack.c.h.b16 %v1422
    %v1632 = vunpack.c.l.b16 %v1423
    %v1633 = vunpack.c.h.b16 %v1423
    %v1634 = vunpack.c.l.b16 %v1424
    %v1635 = vunpack.c.h.b16 %v1424
    %v1636 = vunpack.c.l.b16 %v1425
    %v1637 = vunpack.c.h.b16 %v1425
    %v1638 = vunpack.c.l.b16 %v1426
    %v1639 = vunpack.c.h.b16 %v1426
    %v1640 = vunpack.c.l.b16 %v1427
    %v1641 = vunpack.c.h.b16 %v1427
    %v1642 = vpack.c.b16 %v1518, %v1514
    %v1643 = vpack.c.b16 %v1519, %v1515
    %v1644 = vpack.c.b16 %v1520, %v1516
    %v1645 = vpack.c.b16 %v1521, %v1517
    %v1646 = vpack.c.b16 %v1526, %v1522
    %v1647 = vpack.c.b16 %v1527, %v1523
    %v1648 = vpack.c.b16 %v1528, %v1524
    %v1649 = vpack.c.b16 %v1529, %v1525
    %v1650 = vpack.c.b16 %v1534, %v1530
    %v1651 = vpack.c.b16 %v1535, %v1531
    %v1652 = vpack.c.b16 %v1536, %v1532
    %v1653 = vpack.c.b16 %v1537, %v1533
    %v1654 = vpack.c.b16 %v1542, %v1538
    %v1655 = vpack.c.b16 %v1543, %v1539
    %v1656 = vpack.c.b16 %v1544, %v1540
    %v1657 = vpack.c.b16 %v1545, %v1541
    %v1658 = vpack.c.b16 %v1550, %v1546
    %v1659 = vpack.c.b16 %v1551, %v1547
    %v1660 = vpack.c.b16 %v1552, %v1548
    %v1661 = vpack.c.b16 %v1553, %v1549
    %v1662 = vpack.c.b16 %v1558, %v1554
    %v1663 = vpack.c.b16 %v1559, %v1555
    %v1664 = vpack.c.b16 %v1560, %v1556
    %v1665 = vpack.c.b16 %v1561, %v1557
    %v1666 = vpack.c.b16 %v1566, %v1562
    %v1667 = vpack.c.b16 %v1567, %v1563
    %v1668 = vpack.c.b16 %v1568, %v1564
    %v1669 = vpack.c.b16 %v1569, %v1565
    %v1670 = vpack.c.b16 %v1574, %v1570
    %v1671 = vpack.c.b16 %v1575, %v1571
    %v1672 = vpack.c.b16 %v1576, %v1572
    %v1673 = vpack.c.b16 %v1577, %v1573
    %v1674 = vpack.c.b16 %v1582, %v1578
    %v1675 = vpack.c.b16 %v1583, %v1579
    %v1676 = vpack.c.b16 %v1584, %v1580
    %v1677 = vpack.c.b16 %v1585, %v1581
    %v1678 = vpack.c.b16 %v1590, %v1586
    %v1679 = vpack.c.b16 %v1591, %v1587
    %v1680 = vpack.c.b16 %v1592, %v1588
    %v1681 = vpack.c.b16 %v1593, %v1589
    %v1682 = vpack.c.b16 %v1598, %v1594
    %v1683 = vpack.c.b16 %v1599, %v1595
    %v1684 = vpack.c.b16 %v1600, %v1596
    %v1685 = vpack.c.b16 %v1601, %v1597
    %v1686 = vpack.c.b16 %v1606, %v1602
    %v1687 = vpack.c.b16 %v1607, %v1603
    %v1688 = vpack.c.b16 %v1608, %v1604
    %v1689 = vpack.c.b16 %v1609, %v1605
    %v1690 = vpack.c.b16 %v1614, %v1610
    %v1691 = vpack.c.b16 %v1615, %v1611
    %v1692 = vpack.c.b16 %v1616, %v1612
    %v1693 = vpack.c.b16 %v1617, %v1613
    %v1694 = vpack.c.b16 %v1622, %v1618
    %v1695 = vpack.c.b16 %v1623, %v1619
    %v1696 = vpack.c.b16 %v1624, %v1620
    %v1697 = vpack.c.b16 %v1625, %v1621
    %v1698 = vpack.c.b16 %v1630, %v1626
    %v1699 = vpack.c.b16 %v1631, %v1627
    %v1700 = vpack.c.b16 %v1632, %v1628
    %v1701 = vpack.c.b16 %v1633, %v1629
    %v1702 = vpack.c.b16 %v1638, %v1634
    %v1703 = vpack.c.b16 %v1639, %v1635
    %v1704 = vpack.c.b16 %v1640, %v1636
    %v1705 = vpack.c.b16 %v1641, %v1637
    %1770 = vmatprep.subr.bf16.mxu0 %v1643
    %1771 = vmatpush1.bf16.msra.mxu0 %v1642
    %1772 = vmatprep.subr.bf16.mxu0 %v1647
    %1773 = vmatpush1.bf16.msra.mxu0 %v1646
    %1774 = vmatprep.subr.bf16.mxu0 %v1651
    %1775 = vmatpush1.bf16.msra.mxu0 %v1650
    %1776 = vmatprep.subr.bf16.mxu0 %v1655
    %1777 = vmatpush1.bf16.msra.mxu0 %v1654
    %1778 = vmatprep.subr.bf16.mxu0 %v1659
    %1779 = vmatpush1.bf16.msra.mxu0 %v1658
    %1780 = vmatprep.subr.bf16.mxu0 %v1663
    %1781 = vmatpush1.bf16.msra.mxu0 %v1662
    %1782 = vmatprep.subr.bf16.mxu0 %v1667
    %1783 = vmatpush1.bf16.msra.mxu0 %v1666
    %1784 = vmatprep.subr.bf16.mxu0 %v1671
    %1785 = vmatpush1.bf16.msra.mxu0 %v1670
    %1786 = vmatprep.subr.bf16.mxu0 %v1675
    %1787 = vmatpush1.bf16.msra.mxu0 %v1674
    %1788 = vmatprep.subr.bf16.mxu0 %v1679
    %1789 = vmatpush1.bf16.msra.mxu0 %v1678
    %1790 = vmatprep.subr.bf16.mxu0 %v1683
    %1791 = vmatpush1.bf16.msra.mxu0 %v1682
    %1792 = vmatprep.subr.bf16.mxu0 %v1687
    %1793 = vmatpush1.bf16.msra.mxu0 %v1686
    %1794 = vmatprep.subr.bf16.mxu0 %v1691
    %1795 = vmatpush1.bf16.msra.mxu0 %v1690
    %1796 = vmatprep.subr.bf16.mxu0 %v1695
    %1797 = vmatpush1.bf16.msra.mxu0 %v1694
    %1798 = vmatprep.subr.bf16.mxu0 %v1699
    %1799 = vmatpush1.bf16.msra.mxu0 %v1698
    %1800 = vmatprep.subr.bf16.mxu0 %v1703
    %1801 = vmatpush1.bf16.msra.mxu0 %v1702
    %1802 = vmatprep.mubr.bf16.mxu0 %v1363
    %1803 = vmatmul.mubr.bf16.gmra.mrb[0].mxu0 %v1362
    %v1804 = vpop.f32.mrb[0].mxu0
    %v1805 = vadd.f32 %v1433, %v1804
    %v1806 = vpop.f32.mrb[0].mxu0
    %v1807 = vadd.f32 %v1437, %v1806
    %v1808 = vpop.f32.mrb[0].mxu0
    %v1809 = vadd.f32 %v1433, %v1808
    %v1810 = vpop.f32.mrb[0].mxu0
    %v1811 = vadd.f32 %v1437, %v1810
    %1812 = vdwg.mxu0
    %1813 = vmatprep.subr.bf16.mxu0 %v1645
    %1814 = vmatpush1.bf16.msra.mxu0 %v1644
    %1815 = vmatprep.subr.bf16.mxu0 %v1649
    %1816 = vmatpush1.bf16.msra.mxu0 %v1648
    %1817 = vmatprep.subr.bf16.mxu0 %v1653
    %1818 = vmatpush1.bf16.msra.mxu0 %v1652
    %1819 = vmatprep.subr.bf16.mxu0 %v1657
    %1820 = vmatpush1.bf16.msra.mxu0 %v1656
    %1821 = vmatprep.subr.bf16.mxu0 %v1661
    %1822 = vmatpush1.bf16.msra.mxu0 %v1660
    %1823 = vmatprep.subr.bf16.mxu0 %v1665
    %1824 = vmatpush1.bf16.msra.mxu0 %v1664
    %1825 = vmatprep.subr.bf16.mxu0 %v1669
    %1826 = vmatpush1.bf16.msra.mxu0 %v1668
    %1827 = vmatprep.subr.bf16.mxu0 %v1673
    %1828 = vmatpush1.bf16.msra.mxu0 %v1672
    %1829 = vmatprep.subr.bf16.mxu0 %v1677
    %1830 = vmatpush1.bf16.msra.mxu0 %v1676
    %1831 = vmatprep.subr.bf16.mxu0 %v1681
    %1832 = vmatpush1.bf16.msra.mxu0 %v1680
    %1833 = vmatprep.subr.bf16.mxu0 %v1685
    %1834 = vmatpush1.bf16.msra.mxu0 %v1684
    %1835 = vmatprep.subr.bf16.mxu0 %v1689
    %1836 = vmatpush1.bf16.msra.mxu0 %v1688
    %1837 = vmatprep.subr.bf16.mxu0 %v1693
    %1838 = vmatpush1.bf16.msra.mxu0 %v1692
    %1839 = vmatprep.subr.bf16.mxu0 %v1697
    %1840 = vmatpush1.bf16.msra.mxu0 %v1696
    %1841 = vmatprep.subr.bf16.mxu0 %v1701
    %1842 = vmatpush1.bf16.msra.mxu0 %v1700
    %1843 = vmatprep.subr.bf16.mxu0 %v1705
    %1844 = vmatpush1.bf16.msra.mxu0 %v1704
    %1845 = vmatprep.mubr.bf16.mxu0 %v1363
    %1846 = vmatmul.mubr.bf16.gmra.mrb[0].mxu0 %v1362
    %v1847 = vpop.f32.mrb[0].mxu0
    %v1848 = vadd.f32 %v1441, %v1847
    %v1849 = vpop.f32.mrb[0].mxu0
    %v1850 = vadd.f32 %v1445, %v1849
    %v1851 = vpop.f32.mrb[0].mxu0
    %v1852 = vadd.f32 %v1441, %v1851
    %v1853 = vpop.f32.mrb[0].mxu0
    %v1854 = vadd.f32 %v1445, %v1853
    %1855 = vdwg.mxu0
    %v1856 = vmax.f32 %v1805, 0.0
    %v1857 = vmax.f32 %v1807, 0.0
    %v1858 = vmax.f32 %v1848, 0.0
    %v1859 = vmax.f32 %v1850, 0.0
    %v1860 = vmax.f32 %v1809, 0.0
    %v1861 = vmax.f32 %v1811, 0.0
    %v1862 = vmax.f32 %v1852, 0.0
    %v1863 = vmax.f32 %v1854, 0.0
    %v1864 = vpack.c.bf16 %v545, %v1856
    %v1865 = vpack.c.bf16 %v546, %v1857
    %v1866 = vpack.c.bf16 %v547, %v1858
    %v1867 = vpack.c.bf16 %v548, %v1859
    %v1868 = vpack.c.bf16 %v1860, %v1860
    %v1869 = vpack.c.bf16 %v1861, %v1861
    %v1870 = vpack.c.bf16 %v1862, %v1862
    %v1871 = vpack.c.bf16 %v1863, %v1863
    %v1872 = vld [vmem:[%s11] sm:$0xff]
    %v1873 = vld [vmem:[%s11 + $0x8] sm:$0xff]
    %v1874 = vld [vmem:[%s11 + $0x10] sm:$0xff]
    %v1875 = vld [vmem:[%s11 + $0x18] sm:$0xff]
    %v1876 = vld [vmem:[%s11 + $0x20] sm:$0xff]
    %v1877 = vld [vmem:[%s11 + $0x28] sm:$0xff]
    %v1878 = vld [vmem:[%s11 + $0x30] sm:$0xff]
    %v1879 = vld [vmem:[%s11 + $0x38] sm:$0xff]
    %v1880 = vld [vmem:[%s11 + $0x40] sm:$0xff]
    %v1881 = vld [vmem:[%s11 + $0x48] sm:$0xff]
    %v1882 = vld [vmem:[%s11 + $0x50] sm:$0xff]
    %v1883 = vld [vmem:[%s11 + $0x58] sm:$0xff]
    %v1884 = vld [vmem:[%s11 + $0x60] sm:$0xff]
    %v1885 = vld [vmem:[%s11 + $0x68] sm:$0xff]
    %v1886 = vld [vmem:[%s11 + $0x70] sm:$0xff]
    %v1887 = vld [vmem:[%s11 + $0x78] sm:$0xff]
    %v1888 = vld [vmem:[%s11 + $0x80] sm:$0xff]
    %v1889 = vld [vmem:[%s11 + $0x88] sm:$0xff]
    %v1890 = vld [vmem:[%s11 + $0x90] sm:$0xff]
    %v1891 = vld [vmem:[%s11 + $0x98] sm:$0xff]
    %v1892 = vld [vmem:[%s11 + $0xa0] sm:$0xff]
    %v1893 = vld [vmem:[%s11 + $0xa8] sm:$0xff]
    %v1894 = vld [vmem:[%s11 + $0xb0] sm:$0xff]
    %v1895 = vld [vmem:[%s11 + $0xb8] sm:$0xff]
    %v1896 = vld [vmem:[%s11 + $0xc0] sm:$0xff]
    %v1897 = vld [vmem:[%s11 + $0xc8] sm:$0xff]
    %v1898 = vld [vmem:[%s11 + $0xd0] sm:$0xff]
    %v1899 = vld [vmem:[%s11 + $0xd8] sm:$0xff]
    %v1900 = vld [vmem:[%s11 + $0xe0] sm:$0xff]
    %v1901 = vld [vmem:[%s11 + $0xe8] sm:$0xff]
    %v1902 = vld [vmem:[%s11 + $0xf0] sm:$0xff]
    %v1903 = vld [vmem:[%s11 + $0xf8] sm:$0xff]
    %v1904 = vld [vmem:[%s11 + $0x100] sm:$0xff]
    %v1905 = vld [vmem:[%s11 + $0x108] sm:$0xff]
    %v1906 = vld [vmem:[%s11 + $0x110] sm:$0xff]
    %v1907 = vld [vmem:[%s11 + $0x118] sm:$0xff]
    %v1908 = vld [vmem:[%s11 + $0x120] sm:$0xff]
    %v1909 = vld [vmem:[%s11 + $0x128] sm:$0xff]
    %v1910 = vld [vmem:[%s11 + $0x130] sm:$0xff]
    %v1911 = vld [vmem:[%s11 + $0x138] sm:$0xff]
    %v1912 = vld [vmem:[%s11 + $0x140] sm:$0xff]
    %v1913 = vld [vmem:[%s11 + $0x148] sm:$0xff]
    %v1914 = vld [vmem:[%s11 + $0x150] sm:$0xff]
    %v1915 = vld [vmem:[%s11 + $0x158] sm:$0xff]
    %v1916 = vld [vmem:[%s11 + $0x160] sm:$0xff]
    %v1917 = vld [vmem:[%s11 + $0x168] sm:$0xff]
    %v1918 = vld [vmem:[%s11 + $0x170] sm:$0xff]
    %v1919 = vld [vmem:[%s11 + $0x178] sm:$0xff]
    %v1920 = vld [vmem:[%s11 + $0x180] sm:$0xff]
    %v1921 = vld [vmem:[%s11 + $0x188] sm:$0xff]
    %v1922 = vld [vmem:[%s11 + $0x190] sm:$0xff]
    %v1923 = vld [vmem:[%s11 + $0x198] sm:$0xff]
    %v1924 = vld [vmem:[%s11 + $0x1a0] sm:$0xff]
    %v1925 = vld [vmem:[%s11 + $0x1a8] sm:$0xff]
    %v1926 = vld [vmem:[%s11 + $0x1b0] sm:$0xff]
    %v1927 = vld [vmem:[%s11 + $0x1b8] sm:$0xff]
    %v1928 = vld [vmem:[%s11 + $0x1c0] sm:$0xff]
    %v1929 = vld [vmem:[%s11 + $0x1c8] sm:$0xff]
    %v1930 = vld [vmem:[%s11 + $0x1d0] sm:$0xff]
    %v1931 = vld [vmem:[%s11 + $0x1d8] sm:$0xff]
    %v1932 = vld [vmem:[%s11 + $0x1e0] sm:$0xff]
    %v1933 = vld [vmem:[%s11 + $0x1e8] sm:$0xff]
    %v1934 = vld [vmem:[%s11 + $0x1f0] sm:$0xff]
    %v1935 = vld [vmem:[%s11 + $0x1f8] sm:$0xff]
    %v1936 = vld [vmem:[%s12] sm:$0x3]
    %v1938 = vlaneseq
    %v1939 = vshrl.u32 %v1938, 7
    %v1940 = vsub.s32 0, %v1939
    %v1941 = vrot.slane %v1936, %v1940
    %v1942 = vlaneseq
    %v1943 = vshrl.u32 %v1942, 7
    %v1944 = vsub.s32 1, %v1943
    %v1945 = vrot.slane %v1936, %v1944
    %v2012 = vunpack.c.l.b16 %v1872
    %v2013 = vunpack.c.h.b16 %v1872
    %v2014 = vunpack.c.l.b16 %v1873
    %v2015 = vunpack.c.h.b16 %v1873
    %v2016 = vunpack.c.l.b16 %v1874
    %v2017 = vunpack.c.h.b16 %v1874
    %v2018 = vunpack.c.l.b16 %v1875
    %v2019 = vunpack.c.h.b16 %v1875
    %v2020 = vunpack.c.l.b16 %v1876
    %v2021 = vunpack.c.h.b16 %v1876
    %v2022 = vunpack.c.l.b16 %v1877
    %v2023 = vunpack.c.h.b16 %v1877
    %v2024 = vunpack.c.l.b16 %v1878
    %v2025 = vunpack.c.h.b16 %v1878
    %v2026 = vunpack.c.l.b16 %v1879
    %v2027 = vunpack.c.h.b16 %v1879
    %v2028 = vunpack.c.l.b16 %v1880
    %v2029 = vunpack.c.h.b16 %v1880
    %v2030 = vunpack.c.l.b16 %v1881
    %v2031 = vunpack.c.h.b16 %v1881
    %v2032 = vunpack.c.l.b16 %v1882
    %v2033 = vunpack.c.h.b16 %v1882
    %v2034 = vunpack.c.l.b16 %v1883
    %v2035 = vunpack.c.h.b16 %v1883
    %v2036 = vunpack.c.l.b16 %v1884
    %v2037 = vunpack.c.h.b16 %v1884
    %v2038 = vunpack.c.l.b16 %v1885
    %v2039 = vunpack.c.h.b16 %v1885
    %v2040 = vunpack.c.l.b16 %v1886
    %v2041 = vunpack.c.h.b16 %v1886
    %v2042 = vunpack.c.l.b16 %v1887
    %v2043 = vunpack.c.h.b16 %v1887
    %v2044 = vunpack.c.l.b16 %v1888
    %v2045 = vunpack.c.h.b16 %v1888
    %v2046 = vunpack.c.l.b16 %v1889
    %v2047 = vunpack.c.h.b16 %v1889
    %v2048 = vunpack.c.l.b16 %v1890
    %v2049 = vunpack.c.h.b16 %v1890
    %v2050 = vunpack.c.l.b16 %v1891
    %v2051 = vunpack.c.h.b16 %v1891
    %v2052 = vunpack.c.l.b16 %v1892
    %v2053 = vunpack.c.h.b16 %v1892
    %v2054 = vunpack.c.l.b16 %v1893
    %v2055 = vunpack.c.h.b16 %v1893
    %v2056 = vunpack.c.l.b16 %v1894
    %v2057 = vunpack.c.h.b16 %v1894
    %v2058 = vunpack.c.l.b16 %v1895
    %v2059 = vunpack.c.h.b16 %v1895
    %v2060 = vunpack.c.l.b16 %v1896
    %v2061 = vunpack.c.h.b16 %v1896
    %v2062 = vunpack.c.l.b16 %v1897
    %v2063 = vunpack.c.h.b16 %v1897
    %v2064 = vunpack.c.l.b16 %v1898
    %v2065 = vunpack.c.h.b16 %v1898
    %v2066 = vunpack.c.l.b16 %v1899
    %v2067 = vunpack.c.h.b16 %v1899
    %v2068 = vunpack.c.l.b16 %v1900
    %v2069 = vunpack.c.h.b16 %v1900
    %v2070 = vunpack.c.l.b16 %v1901
    %v2071 = vunpack.c.h.b16 %v1901
    %v2072 = vunpack.c.l.b16 %v1902
    %v2073 = vunpack.c.h.b16 %v1902
    %v2074 = vunpack.c.l.b16 %v1903
    %v2075 = vunpack.c.h.b16 %v1903
    %v2076 = vunpack.c.l.b16 %v1904
    %v2077 = vunpack.c.h.b16 %v1904
    %v2078 = vunpack.c.l.b16 %v1905
    %v2079 = vunpack.c.h.b16 %v1905
    %v2080 = vunpack.c.l.b16 %v1906
    %v2081 = vunpack.c.h.b16 %v1906
    %v2082 = vunpack.c.l.b16 %v1907
    %v2083 = vunpack.c.h.b16 %v1907
    %v2084 = vunpack.c.l.b16 %v1908
    %v2085 = vunpack.c.h.b16 %v1908
    %v2086 = vunpack.c.l.b16 %v1909
    %v2087 = vunpack.c.h.b16 %v1909
    %v2088 = vunpack.c.l.b16 %v1910
    %v2089 = vunpack.c.h.b16 %v1910
    %v2090 = vunpack.c.l.b16 %v1911
    %v2091 = vunpack.c.h.b16 %v1911
    %v2092 = vunpack.c.l.b16 %v1912
    %v2093 = vunpack.c.h.b16 %v1912
    %v2094 = vunpack.c.l.b16 %v1913
    %v2095 = vunpack.c.h.b16 %v1913
    %v2096 = vunpack.c.l.b16 %v1914
    %v2097 = vunpack.c.h.b16 %v1914
    %v2098 = vunpack.c.l.b16 %v1915
    %v2099 = vunpack.c.h.b16 %v1915
    %v2100 = vunpack.c.l.b16 %v1916
    %v2101 = vunpack.c.h.b16 %v1916
    %v2102 = vunpack.c.l.b16 %v1917
    %v2103 = vunpack.c.h.b16 %v1917
    %v2104 = vunpack.c.l.b16 %v1918
    %v2105 = vunpack.c.h.b16 %v1918
    %v2106 = vunpack.c.l.b16 %v1919
    %v2107 = vunpack.c.h.b16 %v1919
    %v2108 = vunpack.c.l.b16 %v1920
    %v2109 = vunpack.c.h.b16 %v1920
    %v2110 = vunpack.c.l.b16 %v1921
    %v2111 = vunpack.c.h.b16 %v1921
    %v2112 = vunpack.c.l.b16 %v1922
    %v2113 = vunpack.c.h.b16 %v1922
    %v2114 = vunpack.c.l.b16 %v1923
    %v2115 = vunpack.c.h.b16 %v1923
    %v2116 = vunpack.c.l.b16 %v1924
    %v2117 = vunpack.c.h.b16 %v1924
    %v2118 = vunpack.c.l.b16 %v1925
    %v2119 = vunpack.c.h.b16 %v1925
    %v2120 = vunpack.c.l.b16 %v1926
    %v2121 = vunpack.c.h.b16 %v1926
    %v2122 = vunpack.c.l.b16 %v1927
    %v2123 = vunpack.c.h.b16 %v1927
    %v2124 = vunpack.c.l.b16 %v1928
    %v2125 = vunpack.c.h.b16 %v1928
    %v2126 = vunpack.c.l.b16 %v1929
    %v2127 = vunpack.c.h.b16 %v1929
    %v2128 = vunpack.c.l.b16 %v1930
    %v2129 = vunpack.c.h.b16 %v1930
    %v2130 = vunpack.c.l.b16 %v1931
    %v2131 = vunpack.c.h.b16 %v1931
    %v2132 = vunpack.c.l.b16 %v1932
    %v2133 = vunpack.c.h.b16 %v1932
    %v2134 = vunpack.c.l.b16 %v1933
    %v2135 = vunpack.c.h.b16 %v1933
    %v2136 = vunpack.c.l.b16 %v1934
    %v2137 = vunpack.c.h.b16 %v1934
    %v2138 = vunpack.c.l.b16 %v1935
    %v2139 = vunpack.c.h.b16 %v1935
    %v2140 = vpack.c.b16 %v2014, %v2012
    %v2141 = vpack.c.b16 %v2015, %v2013
    %v2142 = vpack.c.b16 %v2018, %v2016
    %v2143 = vpack.c.b16 %v2019, %v2017
    %v2144 = vpack.c.b16 %v2022, %v2020
    %v2145 = vpack.c.b16 %v2023, %v2021
    %v2146 = vpack.c.b16 %v2026, %v2024
    %v2147 = vpack.c.b16 %v2027, %v2025
    %v2148 = vpack.c.b16 %v2030, %v2028
    %v2149 = vpack.c.b16 %v2031, %v2029
    %v2150 = vpack.c.b16 %v2034, %v2032
    %v2151 = vpack.c.b16 %v2035, %v2033
    %v2152 = vpack.c.b16 %v2038, %v2036
    %v2153 = vpack.c.b16 %v2039, %v2037
    %v2154 = vpack.c.b16 %v2042, %v2040
    %v2155 = vpack.c.b16 %v2043, %v2041
    %v2156 = vpack.c.b16 %v2046, %v2044
    %v2157 = vpack.c.b16 %v2047, %v2045
    %v2158 = vpack.c.b16 %v2050, %v2048
    %v2159 = vpack.c.b16 %v2051, %v2049
    %v2160 = vpack.c.b16 %v2054, %v2052
    %v2161 = vpack.c.b16 %v2055, %v2053
    %v2162 = vpack.c.b16 %v2058, %v2056
    %v2163 = vpack.c.b16 %v2059, %v2057
    %v2164 = vpack.c.b16 %v2062, %v2060
    %v2165 = vpack.c.b16 %v2063, %v2061
    %v2166 = vpack.c.b16 %v2066, %v2064
    %v2167 = vpack.c.b16 %v2067, %v2065
    %v2168 = vpack.c.b16 %v2070, %v2068
    %v2169 = vpack.c.b16 %v2071, %v2069
    %v2170 = vpack.c.b16 %v2074, %v2072
    %v2171 = vpack.c.b16 %v2075, %v2073
    %v2172 = vpack.c.b16 %v2078, %v2076
    %v2173 = vpack.c.b16 %v2079, %v2077
    %v2174 = vpack.c.b16 %v2082, %v2080
    %v2175 = vpack.c.b16 %v2083, %v2081
    %v2176 = vpack.c.b16 %v2086, %v2084
    %v2177 = vpack.c.b16 %v2087, %v2085
    %v2178 = vpack.c.b16 %v2090, %v2088
    %v2179 = vpack.c.b16 %v2091, %v2089
    %v2180 = vpack.c.b16 %v2094, %v2092
    %v2181 = vpack.c.b16 %v2095, %v2093
    %v2182 = vpack.c.b16 %v2098, %v2096
    %v2183 = vpack.c.b16 %v2099, %v2097
    %v2184 = vpack.c.b16 %v2102, %v2100
    %v2185 = vpack.c.b16 %v2103, %v2101
    %v2186 = vpack.c.b16 %v2106, %v2104
    %v2187 = vpack.c.b16 %v2107, %v2105
    %v2188 = vpack.c.b16 %v2110, %v2108
    %v2189 = vpack.c.b16 %v2111, %v2109
    %v2190 = vpack.c.b16 %v2114, %v2112
    %v2191 = vpack.c.b16 %v2115, %v2113
    %v2192 = vpack.c.b16 %v2118, %v2116
    %v2193 = vpack.c.b16 %v2119, %v2117
    %v2194 = vpack.c.b16 %v2122, %v2120
    %v2195 = vpack.c.b16 %v2123, %v2121
    %v2196 = vpack.c.b16 %v2126, %v2124
    %v2197 = vpack.c.b16 %v2127, %v2125
    %v2198 = vpack.c.b16 %v2130, %v2128
    %v2199 = vpack.c.b16 %v2131, %v2129
    %v2200 = vpack.c.b16 %v2134, %v2132
    %v2201 = vpack.c.b16 %v2135, %v2133
    %v2202 = vpack.c.b16 %v2138, %v2136
    %v2203 = vpack.c.b16 %v2139, %v2137
    %2268 = vmatprep.subr.bf16.mxu0 %v2141
    %2269 = vmatpush1.bf16.msra.mxu0 %v2140
    %2270 = vmatprep.subr.bf16.mxu0 %v2143
    %2271 = vmatpush1.bf16.msra.mxu0 %v2142
    %2272 = vmatprep.subr.bf16.mxu0 %v2145
    %2273 = vmatpush1.bf16.msra.mxu0 %v2144
    %2274 = vmatprep.subr.bf16.mxu0 %v2147
    %2275 = vmatpush1.bf16.msra.mxu0 %v2146
    %2276 = vmatprep.subr.bf16.mxu0 %v2149
    %2277 = vmatpush1.bf16.msra.mxu0 %v2148
    %2278 = vmatprep.subr.bf16.mxu0 %v2151
    %2279 = vmatpush1.bf16.msra.mxu0 %v2150
    %2280 = vmatprep.subr.bf16.mxu0 %v2153
    %2281 = vmatpush1.bf16.msra.mxu0 %v2152
    %2282 = vmatprep.subr.bf16.mxu0 %v2155
    %2283 = vmatpush1.bf16.msra.mxu0 %v2154
    %2284 = vmatprep.subr.bf16.mxu0 %v2157
    %2285 = vmatpush1.bf16.msra.mxu0 %v2156
    %2286 = vmatprep.subr.bf16.mxu0 %v2159
    %2287 = vmatpush1.bf16.msra.mxu0 %v2158
    %2288 = vmatprep.subr.bf16.mxu0 %v2161
    %2289 = vmatpush1.bf16.msra.mxu0 %v2160
    %2290 = vmatprep.subr.bf16.mxu0 %v2163
    %2291 = vmatpush1.bf16.msra.mxu0 %v2162
    %2292 = vmatprep.subr.bf16.mxu0 %v2165
    %2293 = vmatpush1.bf16.msra.mxu0 %v2164
    %2294 = vmatprep.subr.bf16.mxu0 %v2167
    %2295 = vmatpush1.bf16.msra.mxu0 %v2166
    %2296 = vmatprep.subr.bf16.mxu0 %v2169
    %2297 = vmatpush1.bf16.msra.mxu0 %v2168
    %2298 = vmatprep.subr.bf16.mxu0 %v2171
    %2299 = vmatpush1.bf16.msra.mxu0 %v2170
    %2300 = vmatprep.mubr.bf16.mxu0 %v1865
    %2301 = vmatmul.mubr.bf16.gmra.mrb[0].mxu0 %v1864
    %v2302 = vpop.f32.mrb[0].mxu0
    %v2303 = vadd.f32 %v1941, %v2302
    %v2304 = vpop.f32.mrb[0].mxu0
    %v2305 = vadd.f32 %v1945, %v2304
    %v2306 = vpop.f32.mrb[0].mxu0
    %v2307 = vadd.f32 %v1941, %v2306
    %v2308 = vpop.f32.mrb[0].mxu0
    %v2309 = vadd.f32 %v1945, %v2308
    %2310 = vmatprep.mubr.bf16.mxu0 %v1869
    %2311 = vmatmul.mubr.bf16.gmra.mrb[0].mxu0 %v1868
    %v2312 = vpop.f32.mrb[0].mxu0
    %v2313 = vadd.f32 %v1941, %v2312
    %v2314 = vpop.f32.mrb[0].mxu0
    %v2315 = vadd.f32 %v1945, %v2314
    %v2316 = vpop.f32.mrb[0].mxu0
    %v2317 = vpop.f32.mrb[0].mxu0
    %2318 = vdwg.mxu0
    %2319 = vmatprep.subr.bf16.mxu0 %v2173
    %2320 = vmatpush1.bf16.msra.mxu0 %v2172
    %2321 = vmatprep.subr.bf16.mxu0 %v2175
    %2322 = vmatpush1.bf16.msra.mxu0 %v2174
    %2323 = vmatprep.subr.bf16.mxu0 %v2177
    %2324 = vmatpush1.bf16.msra.mxu0 %v2176
    %2325 = vmatprep.subr.bf16.mxu0 %v2179
    %2326 = vmatpush1.bf16.msra.mxu0 %v2178
    %2327 = vmatprep.subr.bf16.mxu0 %v2181
    %2328 = vmatpush1.bf16.msra.mxu0 %v2180
    %2329 = vmatprep.subr.bf16.mxu0 %v2183
    %2330 = vmatpush1.bf16.msra.mxu0 %v2182
    %2331 = vmatprep.subr.bf16.mxu0 %v2185
    %2332 = vmatpush1.bf16.msra.mxu0 %v2184
    %2333 = vmatprep.subr.bf16.mxu0 %v2187
    %2334 = vmatpush1.bf16.msra.mxu0 %v2186
    %2335 = vmatprep.subr.bf16.mxu0 %v2189
    %2336 = vmatpush1.bf16.msra.mxu0 %v2188
    %2337 = vmatprep.subr.bf16.mxu0 %v2191
    %2338 = vmatpush1.bf16.msra.mxu0 %v2190
    %2339 = vmatprep.subr.bf16.mxu0 %v2193
    %2340 = vmatpush1.bf16.msra.mxu0 %v2192
    %2341 = vmatprep.subr.bf16.mxu0 %v2195
    %2342 = vmatpush1.bf16.msra.mxu0 %v2194
    %2343 = vmatprep.subr.bf16.mxu0 %v2197
    %2344 = vmatpush1.bf16.msra.mxu0 %v2196
    %2345 = vmatprep.subr.bf16.mxu0 %v2199
    %2346 = vmatpush1.bf16.msra.mxu0 %v2198
    %2347 = vmatprep.subr.bf16.mxu0 %v2201
    %2348 = vmatpush1.bf16.msra.mxu0 %v2200
    %2349 = vmatprep.subr.bf16.mxu0 %v2203
    %2350 = vmatpush1.bf16.msra.mxu0 %v2202
    %2351 = vmatprep.mubr.bf16.mxu0 %v1867
    %2352 = vmatmul.mubr.bf16.gmra.mrb[0].mxu0 %v1866
    %v2353 = vpop.f32.mrb[0].mxu0
    %v2354 = vadd.f32 %v2303, %v2353
    %v2355 = vpop.f32.mrb[0].mxu0
    %v2356 = vadd.f32 %v2305, %v2355
    %v2357 = vpop.f32.mrb[0].mxu0
    %v2358 = vadd.f32 %v2307, %v2357
    %v2359 = vpop.f32.mrb[0].mxu0
    %v2360 = vadd.f32 %v2309, %v2359
    %2361 = vmatprep.mubr.bf16.mxu0 %v1871
    %2362 = vmatmul.mubr.bf16.gmra.mrb[0].mxu0 %v1870
    %v2363 = vpop.f32.mrb[0].mxu0
    %v2364 = vadd.f32 %v2313, %v2363
    %v2365 = vpop.f32.mrb[0].mxu0
    %v2366 = vadd.f32 %v2315, %v2365
    %v2367 = vpop.f32.mrb[0].mxu0
    %v2368 = vpop.f32.mrb[0].mxu0
    %2369 = vdwg.mxu0
    %2370 = vst [vmem:[#allocation2] sm:$0xff] %v1205
    %2371 = vst [vmem:[#allocation4] sm:$0xff] %v2354
    %2372 = vst [vmem:[#allocation4 + $0x8] sm:$0xff] %v2356
    %2373 = vst [vmem:[#allocation6] sm:$0xff] %v2358
    %2374 = vst [vmem:[#allocation6 + $0x8] sm:$0xff] %v2360
    %2375 = vst [vmem:[#allocation7] sm:$0xff] %v2364
    %2376 = vst [vmem:[#allocation7 + $0x8] sm:$0xff] %v2366
    %2377 = vst [vmem:[#allocation9] sm:$0xff] %v2354
    %2378 = vst [vmem:[#allocation9 + $0x8] sm:$0xff] %v2356
    // Predicated region
    $region54: #{stacked_ae_forward.1} parent=1 // pred_check
      _
    $region55: #{stacked_ae_forward.1} parent=1 // pred_check_branch
      %2380 = sbr.rel (0) target = $region57
    $region56: #{stacked_ae_forward.1} parent=1 // pred_region
      %s2382 = ssub.s32 128, 128
      %2383 = vsyncadd [#allocation3], %s2382
      %s2385 = sshll.u32 [#allocation2], 4
      %s2386 = int_to_ptr.vmem [resolvable:$true] %s2385
      %2388 = dma.vmem_to_hbm [thread:$0]  %s2386, 128, %s13, [#allocation3]
    $region57: #{stacked_ae_forward.1} parent=1 // pred_fallthru
      _
    // Predicated region
    $region58: #{stacked_ae_forward.1} parent=1 // pred_check
      _
    $region59: #{stacked_ae_forward.1} parent=1 // pred_check_branch
      %2390 = sbr.rel (0) target = $region61
    $region60: #{stacked_ae_forward.1} parent=1 // pred_region
      %s2392 = ssub.s32 256, 256
      %2393 = vsyncadd [#allocation5], %s2392
      %s2395 = sshll.u32 [#allocation4], 4
      %s2396 = int_to_ptr.vmem [resolvable:$true] %s2395
      %2398 = dma.vmem_to_hbm [thread:$0]  %s2396, 256, %s14, [#allocation5]
    $region61: #{stacked_ae_forward.1} parent=1 // pred_fallthru
      _
    // Predicated region
    $region62: #{stacked_ae_forward.1} parent=1 // pred_check
      _
    $region63: #{stacked_ae_forward.1} parent=1 // pred_check_branch
      %2400 = sbr.rel (0) target = $region65
    $region64: #{stacked_ae_forward.1} parent=1 // pred_region
      %s2402 = ssub.s32 256, 256
      %2403 = vsyncadd [#allocation5], %s2402
      %s2405 = sshll.u32 [#allocation6], 4
      %s2406 = int_to_ptr.vmem [resolvable:$true] %s2405
      %2408 = dma.vmem_to_hbm [thread:$0]  %s2406, 256, %s15, [#allocation5]
    $region65: #{stacked_ae_forward.1} parent=1 // pred_fallthru
      _
    // Predicated region
    $region66: #{stacked_ae_forward.1} parent=1 // pred_check
      _
    $region67: #{stacked_ae_forward.1} parent=1 // pred_check_branch
      %2410 = sbr.rel (0) target = $region69
    $region68: #{stacked_ae_forward.1} parent=1 // pred_region
      %s2412 = ssub.s32 256, 256
      %2413 = vsyncadd [#allocation8], %s2412
      %s2415 = sshll.u32 [#allocation7], 4
      %s2416 = int_to_ptr.vmem [resolvable:$true] %s2415
      %2418 = dma.vmem_to_hbm [thread:$0]  %s2416, 256, %s16, [#allocation8]
    $region69: #{stacked_ae_forward.1} parent=1 // pred_fallthru
      _
    // Predicated region
    $region70: #{stacked_ae_forward.1} parent=1 // pred_check
      _
    $region71: #{stacked_ae_forward.1} parent=1 // pred_check_branch
      %2420 = sbr.rel (0) target = $region73
    $region72: #{stacked_ae_forward.1} parent=1 // pred_region
      %s2422 = ssub.s32 256, 256
      %2423 = vsyncadd [#allocation8], %s2422
      %s2425 = sshll.u32 [#allocation9], 4
      %s2426 = int_to_ptr.vmem [resolvable:$true] %s2425
      %2428 = dma.vmem_to_hbm [thread:$0]  %s2426, 256, %s17, [#allocation8]
    $region73: #{stacked_ae_forward.1} parent=1 // pred_fallthru
      _
    // Predicated region
    $region74: #{stacked_ae_forward.1} parent=1 // pred_check
      _
    $region75: #{stacked_ae_forward.1} parent=1 // pred_check_branch
      %2430 = sbr.rel (0) target = $region77
    $region76: #{stacked_ae_forward.1} parent=1 // pred_region
      %2431 = dma.done [#allocation3], 128
    $region77: #{stacked_ae_forward.1} parent=1 // pred_fallthru
      _
    // Predicated region
    $region78: #{stacked_ae_forward.1} parent=1 // pred_check
      _
    $region79: #{stacked_ae_forward.1} parent=1 // pred_check_branch
      %2433 = sbr.rel (0) target = $region81
    $region80: #{stacked_ae_forward.1} parent=1 // pred_region
      %2434 = dma.done [#allocation5], 256
    $region81: #{stacked_ae_forward.1} parent=1 // pred_fallthru
      _
    // Predicated region
    $region82: #{stacked_ae_forward.1} parent=1 // pred_check
      _
    $region83: #{stacked_ae_forward.1} parent=1 // pred_check_branch
      %2436 = sbr.rel (0) target = $region85
    $region84: #{stacked_ae_forward.1} parent=1 // pred_region
      %2437 = dma.done [#allocation5], 256
    $region85: #{stacked_ae_forward.1} parent=1 // pred_fallthru
      _
    // Predicated region
    $region86: #{stacked_ae_forward.1} parent=1 // pred_check
      _
    $region87: #{stacked_ae_forward.1} parent=1 // pred_check_branch
      %2439 = sbr.rel (0) target = $region89
    $region88: #{stacked_ae_forward.1} parent=1 // pred_region
      %2440 = dma.done [#allocation8], 256
    $region89: #{stacked_ae_forward.1} parent=1 // pred_fallthru
      _
    // Predicated region
    $region90: #{stacked_ae_forward.1} parent=1 // pred_check
      _
    $region91: #{stacked_ae_forward.1} parent=1 // pred_check_branch
      %2442 = sbr.rel (0) target = $region93
    $region92: #{stacked_ae_forward.1} parent=1 // pred_region
      %2443 = dma.done [#allocation8], 256
    $region93: #{stacked_ae_forward.1} parent=1 // pred_fallthru
      _
    %2444 = vsyncpa [#allocation3], 1
    %2445 = vsyncpa [#allocation5], 1
    %2446 = vsyncpa [#allocation8], 1

</llo_original>
